<compile_context>
chip_gen: v5e
topology: v5e:2x2
jax: 0.10.0
libtpu: 0.0.40
codegen_flags: <defaults>
</compile_context>

<pallas_src>
import math

import jax
import jax.numpy as jnp
from jax.experimental import pallas as pl
from jax.experimental.pallas import tpu as pltpu

# Small synthetic config (stands in for AutoConfig of the checkpoint).
B, S, D = 2, 8, 32          # batch, seq_len, hidden_size
NUM_HEADS = 4
HEAD_DIM = D // NUM_HEADS
FFN = 4 * D                 # 128
NUM_LAYERS = 2
NUM_CLASS = 6               # num_class argument of RobertaClassifier
LN_EPS = 1e-5
NEG_INF = -1e9
BLK = 128                   # lane-aligned packing block width


# ----------------------------- kernel helpers -------------------------------
def _layer_norm(x, gamma, beta):
    mu = jnp.mean(x, axis=-1, keepdims=True)
    var = jnp.mean((x - mu) ** 2, axis=-1, keepdims=True)
    return (x - mu) * jax.lax.rsqrt(var + LN_EPS) * gamma + beta


def _gelu(x):
    # TODO(synk): HF RoBERTa uses exact erf-GELU; tanh approximation used here.
    c = math.sqrt(2.0 / math.pi)
    return 0.5 * x * (1.0 + jnp.tanh(c * (x + 0.044715 * x * x * x)))


# ------------------------------ fused kernel --------------------------------
def roberta_fused_kernel(x_ref, mask_ref, w_ref, w2_ref, p_ref, out_ref):
    """Whole forward (NUM_LAYERS post-LN encoder layers + CLS head), fused."""
    scale = 1.0 / math.sqrt(HEAD_DIM)

    # Additive attention bias: computed & materialized ONCE at (B, S, S) and
    # reused by every layer/head (no per-iteration re-broadcast).
    # NOTE: safe only because position 0 is always unmasked (CLS token).
    bias = jnp.broadcast_to(((1.0 - mask_ref[...]) * NEG_INF)[:, None, :],
                            (B, S, S))

    # Activations stay VMEM/vreg resident as a lane-dense (B*S, D) f32 slab.
    h = x_ref[...].reshape(B * S, D)

    for l in range(NUM_LAYERS):                      # static 2-iteration unroll
        w = w_ref[l]                                 # (D, 3*BLK) bf16 slab
        prm = p_ref[l]                               # (8, BLK)  f32 slab
        wqkv = w[:, 0:3 * D]                         # (D, 3D)
        wo = w[:, BLK:BLK + D]                       # (D, D)
        w1 = w[:, 2 * BLK:2 * BLK + FFN]             # (D, FFN)
        w2 = w2_ref[l]                               # (FFN, D)
        bqkv = prm[0:1, 0:3 * D]
        bo = prm[1:2, 0:D]
        g1, be1 = prm[2:3, 0:D], prm[3:4, 0:D]
        b1 = prm[4:5, 0:FFN]
        b2 = prm[5:6, 0:D]
        g2, be2 = prm[6:7, 0:D], prm[7:8, 0:D]

        # ---- multi-head self-attention (fused QKV projection) -------------
        qkv = jnp.dot(h.astype(jnp.bfloat16), wqkv,
                      preferred_element_type=jnp.float32) + bqkv
        q3 = qkv[:, 0 * D:1 * D].reshape(B, S, D).astype(jnp.bfloat16)
        k3 = qkv[:, 1 * D:2 * D].reshape(B, S, D).astype(jnp.bfloat16)
        v3 = qkv[:, 2 * D:3 * D].reshape(B, S, D).astype(jnp.bfloat16)

        ctx_heads = []
        for hh in range(NUM_HEADS):
            sl = slice(hh * HEAD_DIM, (hh + 1) * HEAD_DIM)
            s = jnp.einsum('bqd,bkd->bqk', q3[:, :, sl], k3[:, :, sl],
                           preferred_element_type=jnp.float32) * scale + bias
            s = s - jnp.max(s, axis=-1, keepdims=True)
            e = jnp.exp(s)
            attnp = e * pl.reciprocal(jnp.sum(e, axis=-1, keepdims=True),
                                      approx=True)
            ctx_heads.append(
                jnp.einsum('bqk,bkd->bqd', attnp.astype(jnp.bfloat16),
                           v3[:, :, sl], preferred_element_type=jnp.float32))
        ctx = jnp.concatenate(ctx_heads, axis=-1).reshape(B * S, D)
        attn = jnp.dot(ctx.astype(jnp.bfloat16), wo,
                       preferred_element_type=jnp.float32) + bo

        # ---- residual + post-LN + FFN (f32 elementwise; bf16 only at MXU) --
        y = _layer_norm(h + attn, g1, be1)
        ff = _gelu(jnp.dot(y.astype(jnp.bfloat16), w1,
                           preferred_element_type=jnp.float32) + b1)
        ff = jnp.dot(ff.astype(jnp.bfloat16), w2,
                     preferred_element_type=jnp.float32) + b2
        h = _layer_norm(y + ff, g2, be2)

    # ---- classification head: x[:,0,:] -> dense1 -> tanh -> dense2 --------
    # nn.Dropout is identity in eval mode, so it is omitted (not faked).
    wh, ph = w_ref[NUM_LAYERS], p_ref[NUM_LAYERS]
    hw1 = wh[:, 0:D]
    hw2 = wh[:, BLK:2 * BLK]          # hw2 zero-padded to a lane-dense 128 cols
    hb1 = ph[0:1, 0:D]
    hb2 = ph[1:2, 0:BLK]
    cls = h.reshape(B, S, D)[:, 0, :]                          # (B, D)
    hd1 = jnp.tanh(jnp.dot(cls.astype(jnp.bfloat16), hw1,
                           preferred_element_type=jnp.float32) + hb1)
    # Lane-dense (B, 128) output block -> unmasked vst; wrapper slices cols.
    out_ref[...] = jnp.dot(hd1.astype(jnp.bfloat16), hw2,
                           preferred_element_type=jnp.float32) + hb2


# ------------------------------ wrapper --------------------------------------
@jax.jit
def roberta_classifier_forward(x, mask, w_pack, w2_pack, p_pack):
    # TODO(synk): self.bert = AutoModel.from_pretrained(check_point) loads a
    # pretrained RoBERTa checkpoint; here it is replaced by a deterministically
    # initialized synthetic transformer encoder of the same functional form.
    vmem = pl.BlockSpec(memory_space=pltpu.MemorySpace.VMEM)
    out_padded = pl.pallas_call(
        roberta_fused_kernel,
        out_shape=jax.ShapeDtypeStruct((B, BLK), jnp.float32),
        in_specs=[vmem] * 5,
        out_specs=vmem,
        compiler_params=pltpu.CompilerParams(vmem_limit_bytes=32 * 1024 * 1024),
    )(x, mask, w_pack, w2_pack, p_pack)
    return out_padded[:, :NUM_CLASS]


# ---------------------------- parameter init --------------------------------
def init_params(key):
    """Builds the 3 packed parameter slabs (bf16 weights, f32 biases/LN)."""
    def dense(k, din, dout):
        k1, k2 = jax.random.split(k)
        w = jax.random.normal(k1, (din, dout), jnp.float32) * 0.02
        b = jax.random.normal(k2, (1, dout), jnp.float32) * 0.02
        return w, b

    def pad_cols(a, width=BLK):
        return jnp.pad(a, ((0, 0), (0, width - a.shape[1])))

    keys = jax.random.split(key, NUM_LAYERS + 1)
    w_slabs, w2_list, p_slabs = [], [], []
    for l in range(NUM_LAYERS):
        ks = jax.random.split(keys[l], 6)
        wq, bq = dense(ks[0], D, D)
        wk, bk = dense(ks[1], D, D)
        wv, bv = dense(ks[2], D, D)
        wo, bo = dense(ks[3], D, D)
        w1, b1 = dense(ks[4], D, FFN)
        w2, b2 = dense(ks[5], FFN, D)
        wqkv = jnp.concatenate([wq, wk, wv], axis=1)             # (D, 3D)
        w_slabs.append(jnp.concatenate(
            [pad_cols(wqkv), pad_cols(wo), w1], axis=1))         # (D, 3*BLK)
        w2_list.append(w2)
        rows = [jnp.concatenate([bq, bk, bv], axis=1),           # row 0: bqkv
                bo,                                              # row 1
                jnp.ones((1, D), jnp.float32),                   # row 2: g1
                jnp.zeros((1, D), jnp.float32),                  # row 3: be1
                b1,                                              # row 4
                b2,                                              # row 5
                jnp.ones((1, D), jnp.float32),                   # row 6: g2
                jnp.zeros((1, D), jnp.float32)]                  # row 7: be2
        p_slabs.append(jnp.concatenate([pad_cols(r) for r in rows], axis=0))

    # Classification head packed as an extra "layer".
    kh = jax.random.split(keys[-1], 2)
    hw1, hb1 = dense(kh[0], D, D)                 # dense1: hidden -> hidden
    hw2, hb2 = dense(kh[1], D, NUM_CLASS)         # dense2: hidden -> num_class
    w_slabs.append(jnp.concatenate(
        [pad_cols(hw1), pad_cols(hw2), jnp.zeros((D, BLK), jnp.float32)],
        axis=1))
    hrows = [hb1, hb2] + [jnp.zeros((1, D), jnp.float32)] * 6
    p_slabs.append(jnp.concatenate([pad_cols(r) for r in hrows], axis=0))

    w_pack = jnp.stack(w_slabs, axis=0).astype(jnp.bfloat16)     # (L+1, D, 384)
    w2_pack = jnp.stack(w2_list, axis=0).astype(jnp.bfloat16)    # (L, FFN, D)
    p_pack = jnp.stack(p_slabs, axis=0)                          # (L+1, 8, 128)
    return w_pack, w2_pack, p_pack


if __name__ == "__main__":
    key = jax.random.PRNGKey(0)
    kx, kp = jax.random.split(key)
    x = jax.random.normal(kx, (B, S, D), jnp.float32)
    mask = jnp.array([[1, 1, 1, 1, 1, 1, 0, 0],
                      [1, 1, 1, 1, 0, 0, 0, 0]], jnp.float32)
    w_pack, w2_pack, p_pack = init_params(kp)

    out = roberta_classifier_forward(x, mask, w_pack, w2_pack, p_pack)
    jax.block_until_ready(out)
    assert out.shape == (B, NUM_CLASS) and out.dtype == jnp.float32
    assert bool(jnp.all(jnp.isfinite(out)))
    print("KERNEL_OK")
</pallas_src>

<mosaic_0001>
module attributes {stable_mosaic.version = 11 : i64} {
  func.func @roberta_fused_kernel(%arg0: memref<2x8x32xf32, #tpu.memory_space<vmem>>, %arg1: memref<2x8xf32, #tpu.memory_space<vmem>>, %arg2: memref<3x32x384xbf16, #tpu.memory_space<vmem>>, %arg3: memref<2x128x32xbf16, #tpu.memory_space<vmem>>, %arg4: memref<3x8x128xf32, #tpu.memory_space<vmem>>, %arg5: memref<2x128xf32, #tpu.memory_space<vmem>>) attributes {dimension_semantics = [], scalar_prefetch = 0 : i64, scratch_operands = 0 : i64, tpu.core_type = #tpu.core_type<tc>} {
    %c0 = arith.constant 0 : index
    %c0_0 = arith.constant 0 : index
    %0 = vector.load %arg1[%c0, %c0_0] : memref<2x8xf32, #tpu.memory_space<vmem>>, vector<2x8xf32>
    %cst = arith.constant 1.000000e+00 : f32
    %1 = vector.broadcast %cst : f32 to vector<2x8xf32>
    %2 = arith.subf %1, %0 : vector<2x8xf32>
    %cst_1 = arith.constant -1.000000e+09 : f32
    %3 = vector.broadcast %cst_1 : f32 to vector<2x8xf32>
    %4 = arith.mulf %2, %3 : vector<2x8xf32>
    %5 = vector.shape_cast %4 : vector<2x8xf32> to vector<2x1x8xf32>
    %6 = vector.shape_cast %5 : vector<2x1x8xf32> to vector<2x1x8xf32>
    %7 = vector.broadcast %6 : vector<2x1x8xf32> to vector<2x8x8xf32>
    %c0_2 = arith.constant 0 : index
    %c0_3 = arith.constant 0 : index
    %c0_4 = arith.constant 0 : index
    %8 = vector.load %arg0[%c0_2, %c0_3, %c0_4] : memref<2x8x32xf32, #tpu.memory_space<vmem>>, vector<2x8x32xf32>
    %9 = vector.shape_cast %8 : vector<2x8x32xf32> to vector<16x32xf32>
    %c0_5 = arith.constant 0 : index
    %c0_6 = arith.constant 0 : index
    %c0_7 = arith.constant 0 : index
    %10 = vector.load %arg2[%c0_5, %c0_6, %c0_7] : memref<3x32x384xbf16, #tpu.memory_space<vmem>>, vector<1x32x384xbf16>
    %11 = vector.shape_cast %10 : vector<1x32x384xbf16> to vector<32x384xbf16>
    %c0_8 = arith.constant 0 : index
    %c0_9 = arith.constant 0 : index
    %c0_10 = arith.constant 0 : index
    %12 = vector.load %arg4[%c0_8, %c0_9, %c0_10] : memref<3x8x128xf32, #tpu.memory_space<vmem>>, vector<1x8x128xf32>
    %13 = vector.shape_cast %12 : vector<1x8x128xf32> to vector<8x128xf32>
    %14 = vector.extract_strided_slice %11 {offsets = [0, 0], sizes = [32, 96], strides = [1, 1]} : vector<32x384xbf16> to vector<32x96xbf16>
    %15 = vector.extract_strided_slice %11 {offsets = [0, 128], sizes = [32, 32], strides = [1, 1]} : vector<32x384xbf16> to vector<32x32xbf16>
    %16 = vector.extract_strided_slice %11 {offsets = [0, 256], sizes = [32, 128], strides = [1, 1]} : vector<32x384xbf16> to vector<32x128xbf16>
    %c0_11 = arith.constant 0 : index
    %c0_12 = arith.constant 0 : index
    %c0_13 = arith.constant 0 : index
    %17 = vector.load %arg3[%c0_11, %c0_12, %c0_13] : memref<2x128x32xbf16, #tpu.memory_space<vmem>>, vector<1x128x32xbf16>
    %18 = vector.shape_cast %17 : vector<1x128x32xbf16> to vector<128x32xbf16>
    %19 = vector.extract_strided_slice %13 {offsets = [0, 0], sizes = [1, 96], strides = [1, 1]} : vector<8x128xf32> to vector<1x96xf32>
    %20 = vector.extract_strided_slice %13 {offsets = [1, 0], sizes = [1, 32], strides = [1, 1]} : vector<8x128xf32> to vector<1x32xf32>
    %21 = vector.extract_strided_slice %13 {offsets = [2, 0], sizes = [1, 32], strides = [1, 1]} : vector<8x128xf32> to vector<1x32xf32>
    %22 = vector.extract_strided_slice %13 {offsets = [3, 0], sizes = [1, 32], strides = [1, 1]} : vector<8x128xf32> to vector<1x32xf32>
    %23 = vector.extract_strided_slice %13 {offsets = [4, 0], sizes = [1, 128], strides = [1, 1]} : vector<8x128xf32> to vector<1x128xf32>
    %24 = vector.extract_strided_slice %13 {offsets = [5, 0], sizes = [1, 32], strides = [1, 1]} : vector<8x128xf32> to vector<1x32xf32>
    %25 = vector.extract_strided_slice %13 {offsets = [6, 0], sizes = [1, 32], strides = [1, 1]} : vector<8x128xf32> to vector<1x32xf32>
    %26 = vector.extract_strided_slice %13 {offsets = [7, 0], sizes = [1, 32], strides = [1, 1]} : vector<8x128xf32> to vector<1x32xf32>
    %27 = arith.truncf %9 : vector<16x32xf32> to vector<16x32xbf16>
    %cst_14 = arith.constant dense<0.000000e+00> : vector<16x96xf32>
    %28 = tpu.matmul %27, %14, %cst_14 {dimension_numbers = #tpu.dot_dimension_numbers<[1], [0], [0], [1], [0, 0, 1, 1], [], []>} : vector<16x32xbf16>, vector<32x96xbf16>, vector<16x96xf32> -> vector<16x96xf32>
    %29 = vector.broadcast %19 : vector<1x96xf32> to vector<16x96xf32>
    %30 = arith.addf %28, %29 : vector<16x96xf32>
    %31 = vector.extract_strided_slice %30 {offsets = [0, 0], sizes = [16, 32], strides = [1, 1]} : vector<16x96xf32> to vector<16x32xf32>
    %32 = vector.shape_cast %31 : vector<16x32xf32> to vector<2x8x32xf32>
    %33 = arith.truncf %32 : vector<2x8x32xf32> to vector<2x8x32xbf16>
    %34 = vector.extract_strided_slice %30 {offsets = [0, 32], sizes = [16, 32], strides = [1, 1]} : vector<16x96xf32> to vector<16x32xf32>
    %35 = vector.shape_cast %34 : vector<16x32xf32> to vector<2x8x32xf32>
    %36 = arith.truncf %35 : vector<2x8x32xf32> to vector<2x8x32xbf16>
    %37 = vector.extract_strided_slice %30 {offsets = [0, 64], sizes = [16, 32], strides = [1, 1]} : vector<16x96xf32> to vector<16x32xf32>
    %38 = vector.shape_cast %37 : vector<16x32xf32> to vector<2x8x32xf32>
    %39 = arith.truncf %38 : vector<2x8x32xf32> to vector<2x8x32xbf16>
    %40 = vector.extract_strided_slice %33 {offsets = [0, 0, 0], sizes = [2, 8, 8], strides = [1, 1, 1]} : vector<2x8x32xbf16> to vector<2x8x8xbf16>
    %41 = vector.extract_strided_slice %36 {offsets = [0, 0, 0], sizes = [2, 8, 8], strides = [1, 1, 1]} : vector<2x8x32xbf16> to vector<2x8x8xbf16>
    "tpu.trace_start"() <{level = 10 : i32, message = "bqd,bkd->bqk"}> : () -> ()
    %cst_15 = arith.constant dense<0.000000e+00> : vector<2x8x8xf32>
    %42 = tpu.matmul %40, %41, %cst_15 {dimension_numbers = #tpu.dot_dimension_numbers<[2], [2], [1], [1], [0, 0, 0, 1, 1, 1], [0], [0]>} : vector<2x8x8xbf16>, vector<2x8x8xbf16>, vector<2x8x8xf32> -> vector<2x8x8xf32>
    "tpu.trace_stop"() : () -> ()
    %cst_16 = arith.constant 0.353553385 : f32
    %43 = vector.broadcast %cst_16 : f32 to vector<2x8x8xf32>
    %44 = arith.mulf %42, %43 : vector<2x8x8xf32>
    %45 = arith.addf %44, %7 : vector<2x8x8xf32>
    %cst_17 = arith.constant dense<0xFF800000> : vector<2x8xf32>
    %46 = vector.multi_reduction <maximumf>, %45, %cst_17 [2] : vector<2x8x8xf32> to vector<2x8xf32>
    %47 = vector.shape_cast %46 : vector<2x8xf32> to vector<2x8x1xf32>
    %48 = vector.broadcast %47 : vector<2x8x1xf32> to vector<2x8x8xf32>
    %49 = arith.subf %45, %48 : vector<2x8x8xf32>
    %50 = math.exp %49 : vector<2x8x8xf32>
    %cst_18 = arith.constant dense<0.000000e+00> : vector<2x8xf32>
    %51 = vector.multi_reduction <add>, %50, %cst_18 [2] : vector<2x8x8xf32> to vector<2x8xf32>
    %52 = vector.shape_cast %51 : vector<2x8xf32> to vector<2x8x1xf32>
    %53 = tpu.reciprocal %52 {approx = true} : vector<2x8x1xf32> -> vector<2x8x1xf32>
    %54 = vector.broadcast %53 : vector<2x8x1xf32> to vector<2x8x8xf32>
    %55 = arith.mulf %50, %54 : vector<2x8x8xf32>
    %56 = arith.truncf %55 : vector<2x8x8xf32> to vector<2x8x8xbf16>
    %57 = vector.extract_strided_slice %39 {offsets = [0, 0, 0], sizes = [2, 8, 8], strides = [1, 1, 1]} : vector<2x8x32xbf16> to vector<2x8x8xbf16>
    "tpu.trace_start"() <{level = 10 : i32, message = "bqk,bkd->bqd"}> : () -> ()
    %cst_19 = arith.constant dense<0.000000e+00> : vector<2x8x8xf32>
    %58 = tpu.matmul %56, %57, %cst_19 {dimension_numbers = #tpu.dot_dimension_numbers<[2], [1], [1], [2], [0, 0, 0, 1, 1, 2], [0], [0]>} : vector<2x8x8xbf16>, vector<2x8x8xbf16>, vector<2x8x8xf32> -> vector<2x8x8xf32>
    "tpu.trace_stop"() : () -> ()
    %59 = vector.extract_strided_slice %33 {offsets = [0, 0, 8], sizes = [2, 8, 8], strides = [1, 1, 1]} : vector<2x8x32xbf16> to vector<2x8x8xbf16>
    %60 = vector.extract_strided_slice %36 {offsets = [0, 0, 8], sizes = [2, 8, 8], strides = [1, 1, 1]} : vector<2x8x32xbf16> to vector<2x8x8xbf16>
    "tpu.trace_start"() <{level = 10 : i32, message = "bqd,bkd->bqk"}> : () -> ()
    %cst_20 = arith.constant dense<0.000000e+00> : vector<2x8x8xf32>
    %61 = tpu.matmul %59, %60, %cst_20 {dimension_numbers = #tpu.dot_dimension_numbers<[2], [2], [1], [1], [0, 0, 0, 1, 1, 1], [0], [0]>} : vector<2x8x8xbf16>, vector<2x8x8xbf16>, vector<2x8x8xf32> -> vector<2x8x8xf32>
    "tpu.trace_stop"() : () -> ()
    %cst_21 = arith.constant 0.353553385 : f32
    %62 = vector.broadcast %cst_21 : f32 to vector<2x8x8xf32>
    %63 = arith.mulf %61, %62 : vector<2x8x8xf32>
    %64 = arith.addf %63, %7 : vector<2x8x8xf32>
    %cst_22 = arith.constant dense<0xFF800000> : vector<2x8xf32>
    %65 = vector.multi_reduction <maximumf>, %64, %cst_22 [2] : vector<2x8x8xf32> to vector<2x8xf32>
    %66 = vector.shape_cast %65 : vector<2x8xf32> to vector<2x8x1xf32>
    %67 = vector.broadcast %66 : vector<2x8x1xf32> to vector<2x8x8xf32>
    %68 = arith.subf %64, %67 : vector<2x8x8xf32>
    %69 = math.exp %68 : vector<2x8x8xf32>
    %cst_23 = arith.constant dense<0.000000e+00> : vector<2x8xf32>
    %70 = vector.multi_reduction <add>, %69, %cst_23 [2] : vector<2x8x8xf32> to vector<2x8xf32>
    %71 = vector.shape_cast %70 : vector<2x8xf32> to vector<2x8x1xf32>
    %72 = tpu.reciprocal %71 {approx = true} : vector<2x8x1xf32> -> vector<2x8x1xf32>
    %73 = vector.broadcast %72 : vector<2x8x1xf32> to vector<2x8x8xf32>
    %74 = arith.mulf %69, %73 : vector<2x8x8xf32>
    %75 = arith.truncf %74 : vector<2x8x8xf32> to vector<2x8x8xbf16>
    %76 = vector.extract_strided_slice %39 {offsets = [0, 0, 8], sizes = [2, 8, 8], strides = [1, 1, 1]} : vector<2x8x32xbf16> to vector<2x8x8xbf16>
    "tpu.trace_start"() <{level = 10 : i32, message = "bqk,bkd->bqd"}> : () -> ()
    %cst_24 = arith.constant dense<0.000000e+00> : vector<2x8x8xf32>
    %77 = tpu.matmul %75, %76, %cst_24 {dimension_numbers = #tpu.dot_dimension_numbers<[2], [1], [1], [2], [0, 0, 0, 1, 1, 2], [0], [0]>} : vector<2x8x8xbf16>, vector<2x8x8xbf16>, vector<2x8x8xf32> -> vector<2x8x8xf32>
    "tpu.trace_stop"() : () -> ()
    %78 = vector.extract_strided_slice %33 {offsets = [0, 0, 16], sizes = [2, 8, 8], strides = [1, 1, 1]} : vector<2x8x32xbf16> to vector<2x8x8xbf16>
    %79 = vector.extract_strided_slice %36 {offsets = [0, 0, 16], sizes = [2, 8, 8], strides = [1, 1, 1]} : vector<2x8x32xbf16> to vector<2x8x8xbf16>
    "tpu.trace_start"() <{level = 10 : i32, message = "bqd,bkd->bqk"}> : () -> ()
    %cst_25 = arith.constant dense<0.000000e+00> : vector<2x8x8xf32>
    %80 = tpu.matmul %78, %79, %cst_25 {dimension_numbers = #tpu.dot_dimension_numbers<[2], [2], [1], [1], [0, 0, 0, 1, 1, 1], [0], [0]>} : vector<2x8x8xbf16>, vector<2x8x8xbf16>, vector<2x8x8xf32> -> vector<2x8x8xf32>
    "tpu.trace_stop"() : () -> ()
    %cst_26 = arith.constant 0.353553385 : f32
    %81 = vector.broadcast %cst_26 : f32 to vector<2x8x8xf32>
    %82 = arith.mulf %80, %81 : vector<2x8x8xf32>
    %83 = arith.addf %82, %7 : vector<2x8x8xf32>
    %cst_27 = arith.constant dense<0xFF800000> : vector<2x8xf32>
    %84 = vector.multi_reduction <maximumf>, %83, %cst_27 [2] : vector<2x8x8xf32> to vector<2x8xf32>
    %85 = vector.shape_cast %84 : vector<2x8xf32> to vector<2x8x1xf32>
    %86 = vector.broadcast %85 : vector<2x8x1xf32> to vector<2x8x8xf32>
    %87 = arith.subf %83, %86 : vector<2x8x8xf32>
    %88 = math.exp %87 : vector<2x8x8xf32>
    %cst_28 = arith.constant dense<0.000000e+00> : vector<2x8xf32>
    %89 = vector.multi_reduction <add>, %88, %cst_28 [2] : vector<2x8x8xf32> to vector<2x8xf32>
    %90 = vector.shape_cast %89 : vector<2x8xf32> to vector<2x8x1xf32>
    %91 = tpu.reciprocal %90 {approx = true} : vector<2x8x1xf32> -> vector<2x8x1xf32>
    %92 = vector.broadcast %91 : vector<2x8x1xf32> to vector<2x8x8xf32>
    %93 = arith.mulf %88, %92 : vector<2x8x8xf32>
    %94 = arith.truncf %93 : vector<2x8x8xf32> to vector<2x8x8xbf16>
    %95 = vector.extract_strided_slice %39 {offsets = [0, 0, 16], sizes = [2, 8, 8], strides = [1, 1, 1]} : vector<2x8x32xbf16> to vector<2x8x8xbf16>
    "tpu.trace_start"() <{level = 10 : i32, message = "bqk,bkd->bqd"}> : () -> ()
    %cst_29 = arith.constant dense<0.000000e+00> : vector<2x8x8xf32>
    %96 = tpu.matmul %94, %95, %cst_29 {dimension_numbers = #tpu.dot_dimension_numbers<[2], [1], [1], [2], [0, 0, 0, 1, 1, 2], [0], [0]>} : vector<2x8x8xbf16>, vector<2x8x8xbf16>, vector<2x8x8xf32> -> vector<2x8x8xf32>
    "tpu.trace_stop"() : () -> ()
    %97 = vector.extract_strided_slice %33 {offsets = [0, 0, 24], sizes = [2, 8, 8], strides = [1, 1, 1]} : vector<2x8x32xbf16> to vector<2x8x8xbf16>
    %98 = vector.extract_strided_slice %36 {offsets = [0, 0, 24], sizes = [2, 8, 8], strides = [1, 1, 1]} : vector<2x8x32xbf16> to vector<2x8x8xbf16>
    "tpu.trace_start"() <{level = 10 : i32, message = "bqd,bkd->bqk"}> : () -> ()
    %cst_30 = arith.constant dense<0.000000e+00> : vector<2x8x8xf32>
    %99 = tpu.matmul %97, %98, %cst_30 {dimension_numbers = #tpu.dot_dimension_numbers<[2], [2], [1], [1], [0, 0, 0, 1, 1, 1], [0], [0]>} : vector<2x8x8xbf16>, vector<2x8x8xbf16>, vector<2x8x8xf32> -> vector<2x8x8xf32>
    "tpu.trace_stop"() : () -> ()
    %cst_31 = arith.constant 0.353553385 : f32
    %100 = vector.broadcast %cst_31 : f32 to vector<2x8x8xf32>
    %101 = arith.mulf %99, %100 : vector<2x8x8xf32>
    %102 = arith.addf %101, %7 : vector<2x8x8xf32>
    %cst_32 = arith.constant dense<0xFF800000> : vector<2x8xf32>
    %103 = vector.multi_reduction <maximumf>, %102, %cst_32 [2] : vector<2x8x8xf32> to vector<2x8xf32>
    %104 = vector.shape_cast %103 : vector<2x8xf32> to vector<2x8x1xf32>
    %105 = vector.broadcast %104 : vector<2x8x1xf32> to vector<2x8x8xf32>
    %106 = arith.subf %102, %105 : vector<2x8x8xf32>
    %107 = math.exp %106 : vector<2x8x8xf32>
    %cst_33 = arith.constant dense<0.000000e+00> : vector<2x8xf32>
    %108 = vector.multi_reduction <add>, %107, %cst_33 [2] : vector<2x8x8xf32> to vector<2x8xf32>
    %109 = vector.shape_cast %108 : vector<2x8xf32> to vector<2x8x1xf32>
    %110 = tpu.reciprocal %109 {approx = true} : vector<2x8x1xf32> -> vector<2x8x1xf32>
    %111 = vector.broadcast %110 : vector<2x8x1xf32> to vector<2x8x8xf32>
    %112 = arith.mulf %107, %111 : vector<2x8x8xf32>
    %113 = arith.truncf %112 : vector<2x8x8xf32> to vector<2x8x8xbf16>
    %114 = vector.extract_strided_slice %39 {offsets = [0, 0, 24], sizes = [2, 8, 8], strides = [1, 1, 1]} : vector<2x8x32xbf16> to vector<2x8x8xbf16>
    "tpu.trace_start"() <{level = 10 : i32, message = "bqk,bkd->bqd"}> : () -> ()
    %cst_34 = arith.constant dense<0.000000e+00> : vector<2x8x8xf32>
    %115 = tpu.matmul %113, %114, %cst_34 {dimension_numbers = #tpu.dot_dimension_numbers<[2], [1], [1], [2], [0, 0, 0, 1, 1, 2], [0], [0]>} : vector<2x8x8xbf16>, vector<2x8x8xbf16>, vector<2x8x8xf32> -> vector<2x8x8xf32>
    "tpu.trace_stop"() : () -> ()
    %116 = tpu.concatenate %58, %77, %96, %115 in 2 : vector<2x8x8xf32>, vector<2x8x8xf32>, vector<2x8x8xf32>, vector<2x8x8xf32> -> vector<2x8x32xf32>
    %117 = vector.shape_cast %116 : vector<2x8x32xf32> to vector<16x32xf32>
    %118 = arith.truncf %117 : vector<16x32xf32> to vector<16x32xbf16>
    %cst_35 = arith.constant dense<0.000000e+00> : vector<16x32xf32>
    %119 = tpu.matmul %118, %15, %cst_35 {dimension_numbers = #tpu.dot_dimension_numbers<[1], [0], [0], [1], [0, 0, 1, 1], [], []>} : vector<16x32xbf16>, vector<32x32xbf16>, vector<16x32xf32> -> vector<16x32xf32>
    %120 = vector.broadcast %20 : vector<1x32xf32> to vector<16x32xf32>
    %121 = arith.addf %119, %120 : vector<16x32xf32>
    %122 = arith.addf %9, %121 : vector<16x32xf32>
    %cst_36 = arith.constant dense<0.000000e+00> : vector<16xf32>
    %123 = vector.multi_reduction <add>, %122, %cst_36 [1] : vector<16x32xf32> to vector<16xf32>
    %124 = vector.shape_cast %123 : vector<16xf32> to vector<16x1xf32>
    %cst_37 = arith.constant 3.200000e+01 : f32
    %125 = vector.broadcast %cst_37 : f32 to vector<16x1xf32>
    %126 = arith.divf %124, %125 : vector<16x1xf32>
    %127 = vector.broadcast %126 : vector<16x1xf32> to vector<16x32xf32>
    %128 = arith.subf %122, %127 : vector<16x32xf32>
    %129 = arith.mulf %128, %128 : vector<16x32xf32>
    %cst_38 = arith.constant dense<0.000000e+00> : vector<16xf32>
    %130 = vector.multi_reduction <add>, %129, %cst_38 [1] : vector<16x32xf32> to vector<16xf32>
    %131 = vector.shape_cast %130 : vector<16xf32> to vector<16x1xf32>
    %cst_39 = arith.constant 3.200000e+01 : f32
    %132 = vector.broadcast %cst_39 : f32 to vector<16x1xf32>
    %133 = arith.divf %131, %132 : vector<16x1xf32>
    %134 = vector.broadcast %126 : vector<16x1xf32> to vector<16x32xf32>
    %135 = arith.subf %122, %134 : vector<16x32xf32>
    %cst_40 = arith.constant 9.99999974E-6 : f32
    %136 = vector.broadcast %cst_40 : f32 to vector<16x1xf32>
    %137 = arith.addf %133, %136 : vector<16x1xf32>
    %138 = math.rsqrt %137 : vector<16x1xf32>
    %139 = vector.broadcast %138 : vector<16x1xf32> to vector<16x32xf32>
    %140 = arith.mulf %135, %139 : vector<16x32xf32>
    %141 = vector.broadcast %21 : vector<1x32xf32> to vector<16x32xf32>
    %142 = arith.mulf %140, %141 : vector<16x32xf32>
    %143 = vector.broadcast %22 : vector<1x32xf32> to vector<16x32xf32>
    %144 = arith.addf %142, %143 : vector<16x32xf32>
    %145 = arith.truncf %144 : vector<16x32xf32> to vector<16x32xbf16>
    %cst_41 = arith.constant dense<0.000000e+00> : vector<16x128xf32>
    %146 = tpu.matmul %145, %16, %cst_41 {dimension_numbers = #tpu.dot_dimension_numbers<[1], [0], [0], [1], [0, 0, 1, 1], [], []>} : vector<16x32xbf16>, vector<32x128xbf16>, vector<16x128xf32> -> vector<16x128xf32>
    %147 = vector.broadcast %23 : vector<1x128xf32> to vector<16x128xf32>
    %148 = arith.addf %146, %147 : vector<16x128xf32>
    %cst_42 = arith.constant 5.000000e-01 : f32
    %149 = vector.broadcast %cst_42 : f32 to vector<16x128xf32>
    %150 = arith.mulf %149, %148 : vector<16x128xf32>
    %cst_43 = arith.constant 4.471500e-02 : f32
    %151 = vector.broadcast %cst_43 : f32 to vector<16x128xf32>
    %152 = arith.mulf %151, %148 : vector<16x128xf32>
    %153 = arith.mulf %152, %148 : vector<16x128xf32>
    %154 = arith.mulf %153, %148 : vector<16x128xf32>
    %155 = arith.addf %148, %154 : vector<16x128xf32>
    %cst_44 = arith.constant 0.797884583 : f32
    %156 = vector.broadcast %cst_44 : f32 to vector<16x128xf32>
    %157 = arith.mulf %156, %155 : vector<16x128xf32>
    %158 = math.tanh %157 : vector<16x128xf32>
    %cst_45 = arith.constant 1.000000e+00 : f32
    %159 = vector.broadcast %cst_45 : f32 to vector<16x128xf32>
    %160 = arith.addf %159, %158 : vector<16x128xf32>
    %161 = arith.mulf %150, %160 : vector<16x128xf32>
    %162 = arith.truncf %161 : vector<16x128xf32> to vector<16x128xbf16>
    %cst_46 = arith.constant dense<0.000000e+00> : vector<16x32xf32>
    %163 = tpu.matmul %162, %18, %cst_46 {dimension_numbers = #tpu.dot_dimension_numbers<[1], [0], [0], [1], [0, 0, 1, 1], [], []>} : vector<16x128xbf16>, vector<128x32xbf16>, vector<16x32xf32> -> vector<16x32xf32>
    %164 = vector.broadcast %24 : vector<1x32xf32> to vector<16x32xf32>
    %165 = arith.addf %163, %164 : vector<16x32xf32>
    %166 = arith.addf %144, %165 : vector<16x32xf32>
    %cst_47 = arith.constant dense<0.000000e+00> : vector<16xf32>
    %167 = vector.multi_reduction <add>, %166, %cst_47 [1] : vector<16x32xf32> to vector<16xf32>
    %168 = vector.shape_cast %167 : vector<16xf32> to vector<16x1xf32>
    %cst_48 = arith.constant 3.200000e+01 : f32
    %169 = vector.broadcast %cst_48 : f32 to vector<16x1xf32>
    %170 = arith.divf %168, %169 : vector<16x1xf32>
    %171 = vector.broadcast %170 : vector<16x1xf32> to vector<16x32xf32>
    %172 = arith.subf %166, %171 : vector<16x32xf32>
    %173 = arith.mulf %172, %172 : vector<16x32xf32>
    %cst_49 = arith.constant dense<0.000000e+00> : vector<16xf32>
    %174 = vector.multi_reduction <add>, %173, %cst_49 [1] : vector<16x32xf32> to vector<16xf32>
    %175 = vector.shape_cast %174 : vector<16xf32> to vector<16x1xf32>
    %cst_50 = arith.constant 3.200000e+01 : f32
    %176 = vector.broadcast %cst_50 : f32 to vector<16x1xf32>
    %177 = arith.divf %175, %176 : vector<16x1xf32>
    %178 = vector.broadcast %170 : vector<16x1xf32> to vector<16x32xf32>
    %179 = arith.subf %166, %178 : vector<16x32xf32>
    %cst_51 = arith.constant 9.99999974E-6 : f32
    %180 = vector.broadcast %cst_51 : f32 to vector<16x1xf32>
    %181 = arith.addf %177, %180 : vector<16x1xf32>
    %182 = math.rsqrt %181 : vector<16x1xf32>
    %183 = vector.broadcast %182 : vector<16x1xf32> to vector<16x32xf32>
    %184 = arith.mulf %179, %183 : vector<16x32xf32>
    %185 = vector.broadcast %25 : vector<1x32xf32> to vector<16x32xf32>
    %186 = arith.mulf %184, %185 : vector<16x32xf32>
    %187 = vector.broadcast %26 : vector<1x32xf32> to vector<16x32xf32>
    %188 = arith.addf %186, %187 : vector<16x32xf32>
    %c1 = arith.constant 1 : index
    %c0_52 = arith.constant 0 : index
    %c0_53 = arith.constant 0 : index
    %189 = vector.load %arg2[%c1, %c0_52, %c0_53] : memref<3x32x384xbf16, #tpu.memory_space<vmem>>, vector<1x32x384xbf16>
    %190 = vector.shape_cast %189 : vector<1x32x384xbf16> to vector<32x384xbf16>
    %c1_54 = arith.constant 1 : index
    %c0_55 = arith.constant 0 : index
    %c0_56 = arith.constant 0 : index
    %191 = vector.load %arg4[%c1_54, %c0_55, %c0_56] : memref<3x8x128xf32, #tpu.memory_space<vmem>>, vector<1x8x128xf32>
    %192 = vector.shape_cast %191 : vector<1x8x128xf32> to vector<8x128xf32>
    %193 = vector.extract_strided_slice %190 {offsets = [0, 0], sizes = [32, 96], strides = [1, 1]} : vector<32x384xbf16> to vector<32x96xbf16>
    %194 = vector.extract_strided_slice %190 {offsets = [0, 128], sizes = [32, 32], strides = [1, 1]} : vector<32x384xbf16> to vector<32x32xbf16>
    %195 = vector.extract_strided_slice %190 {offsets = [0, 256], sizes = [32, 128], strides = [1, 1]} : vector<32x384xbf16> to vector<32x128xbf16>
    %c1_57 = arith.constant 1 : index
    %c0_58 = arith.constant 0 : index
    %c0_59 = arith.constant 0 : index
    %196 = vector.load %arg3[%c1_57, %c0_58, %c0_59] : memref<2x128x32xbf16, #tpu.memory_space<vmem>>, vector<1x128x32xbf16>
    %197 = vector.shape_cast %196 : vector<1x128x32xbf16> to vector<128x32xbf16>
    %198 = vector.extract_strided_slice %192 {offsets = [0, 0], sizes = [1, 96], strides = [1, 1]} : vector<8x128xf32> to vector<1x96xf32>
    %199 = vector.extract_strided_slice %192 {offsets = [1, 0], sizes = [1, 32], strides = [1, 1]} : vector<8x128xf32> to vector<1x32xf32>
    %200 = vector.extract_strided_slice %192 {offsets = [2, 0], sizes = [1, 32], strides = [1, 1]} : vector<8x128xf32> to vector<1x32xf32>
    %201 = vector.extract_strided_slice %192 {offsets = [3, 0], sizes = [1, 32], strides = [1, 1]} : vector<8x128xf32> to vector<1x32xf32>
    %202 = vector.extract_strided_slice %192 {offsets = [4, 0], sizes = [1, 128], strides = [1, 1]} : vector<8x128xf32> to vector<1x128xf32>
    %203 = vector.extract_strided_slice %192 {offsets = [5, 0], sizes = [1, 32], strides = [1, 1]} : vector<8x128xf32> to vector<1x32xf32>
    %204 = vector.extract_strided_slice %192 {offsets = [6, 0], sizes = [1, 32], strides = [1, 1]} : vector<8x128xf32> to vector<1x32xf32>
    %205 = vector.extract_strided_slice %192 {offsets = [7, 0], sizes = [1, 32], strides = [1, 1]} : vector<8x128xf32> to vector<1x32xf32>
    %206 = arith.truncf %188 : vector<16x32xf32> to vector<16x32xbf16>
    %cst_60 = arith.constant dense<0.000000e+00> : vector<16x96xf32>
    %207 = tpu.matmul %206, %193, %cst_60 {dimension_numbers = #tpu.dot_dimension_numbers<[1], [0], [0], [1], [0, 0, 1, 1], [], []>} : vector<16x32xbf16>, vector<32x96xbf16>, vector<16x96xf32> -> vector<16x96xf32>
    %208 = vector.broadcast %198 : vector<1x96xf32> to vector<16x96xf32>
    %209 = arith.addf %207, %208 : vector<16x96xf32>
    %210 = vector.extract_strided_slice %209 {offsets = [0, 0], sizes = [16, 32], strides = [1, 1]} : vector<16x96xf32> to vector<16x32xf32>
    %211 = vector.shape_cast %210 : vector<16x32xf32> to vector<2x8x32xf32>
    %212 = arith.truncf %211 : vector<2x8x32xf32> to vector<2x8x32xbf16>
    %213 = vector.extract_strided_slice %209 {offsets = [0, 32], sizes = [16, 32], strides = [1, 1]} : vector<16x96xf32> to vector<16x32xf32>
    %214 = vector.shape_cast %213 : vector<16x32xf32> to vector<2x8x32xf32>
    %215 = arith.truncf %214 : vector<2x8x32xf32> to vector<2x8x32xbf16>
    %216 = vector.extract_strided_slice %209 {offsets = [0, 64], sizes = [16, 32], strides = [1, 1]} : vector<16x96xf32> to vector<16x32xf32>
    %217 = vector.shape_cast %216 : vector<16x32xf32> to vector<2x8x32xf32>
    %218 = arith.truncf %217 : vector<2x8x32xf32> to vector<2x8x32xbf16>
    %219 = vector.extract_strided_slice %212 {offsets = [0, 0, 0], sizes = [2, 8, 8], strides = [1, 1, 1]} : vector<2x8x32xbf16> to vector<2x8x8xbf16>
    %220 = vector.extract_strided_slice %215 {offsets = [0, 0, 0], sizes = [2, 8, 8], strides = [1, 1, 1]} : vector<2x8x32xbf16> to vector<2x8x8xbf16>
    "tpu.trace_start"() <{level = 10 : i32, message = "bqd,bkd->bqk"}> : () -> ()
    %cst_61 = arith.constant dense<0.000000e+00> : vector<2x8x8xf32>
    %221 = tpu.matmul %219, %220, %cst_61 {dimension_numbers = #tpu.dot_dimension_numbers<[2], [2], [1], [1], [0, 0, 0, 1, 1, 1], [0], [0]>} : vector<2x8x8xbf16>, vector<2x8x8xbf16>, vector<2x8x8xf32> -> vector<2x8x8xf32>
    "tpu.trace_stop"() : () -> ()
    %cst_62 = arith.constant 0.353553385 : f32
    %222 = vector.broadcast %cst_62 : f32 to vector<2x8x8xf32>
    %223 = arith.mulf %221, %222 : vector<2x8x8xf32>
    %224 = arith.addf %223, %7 : vector<2x8x8xf32>
    %cst_63 = arith.constant dense<0xFF800000> : vector<2x8xf32>
    %225 = vector.multi_reduction <maximumf>, %224, %cst_63 [2] : vector<2x8x8xf32> to vector<2x8xf32>
    %226 = vector.shape_cast %225 : vector<2x8xf32> to vector<2x8x1xf32>
    %227 = vector.broadcast %226 : vector<2x8x1xf32> to vector<2x8x8xf32>
    %228 = arith.subf %224, %227 : vector<2x8x8xf32>
    %229 = math.exp %228 : vector<2x8x8xf32>
    %cst_64 = arith.constant dense<0.000000e+00> : vector<2x8xf32>
    %230 = vector.multi_reduction <add>, %229, %cst_64 [2] : vector<2x8x8xf32> to vector<2x8xf32>
    %231 = vector.shape_cast %230 : vector<2x8xf32> to vector<2x8x1xf32>
    %232 = tpu.reciprocal %231 {approx = true} : vector<2x8x1xf32> -> vector<2x8x1xf32>
    %233 = vector.broadcast %232 : vector<2x8x1xf32> to vector<2x8x8xf32>
    %234 = arith.mulf %229, %233 : vector<2x8x8xf32>
    %235 = arith.truncf %234 : vector<2x8x8xf32> to vector<2x8x8xbf16>
    %236 = vector.extract_strided_slice %218 {offsets = [0, 0, 0], sizes = [2, 8, 8], strides = [1, 1, 1]} : vector<2x8x32xbf16> to vector<2x8x8xbf16>
    "tpu.trace_start"() <{level = 10 : i32, message = "bqk,bkd->bqd"}> : () -> ()
    %cst_65 = arith.constant dense<0.000000e+00> : vector<2x8x8xf32>
    %237 = tpu.matmul %235, %236, %cst_65 {dimension_numbers = #tpu.dot_dimension_numbers<[2], [1], [1], [2], [0, 0, 0, 1, 1, 2], [0], [0]>} : vector<2x8x8xbf16>, vector<2x8x8xbf16>, vector<2x8x8xf32> -> vector<2x8x8xf32>
    "tpu.trace_stop"() : () -> ()
    %238 = vector.extract_strided_slice %212 {offsets = [0, 0, 8], sizes = [2, 8, 8], strides = [1, 1, 1]} : vector<2x8x32xbf16> to vector<2x8x8xbf16>
    %239 = vector.extract_strided_slice %215 {offsets = [0, 0, 8], sizes = [2, 8, 8], strides = [1, 1, 1]} : vector<2x8x32xbf16> to vector<2x8x8xbf16>
    "tpu.trace_start"() <{level = 10 : i32, message = "bqd,bkd->bqk"}> : () -> ()
    %cst_66 = arith.constant dense<0.000000e+00> : vector<2x8x8xf32>
    %240 = tpu.matmul %238, %239, %cst_66 {dimension_numbers = #tpu.dot_dimension_numbers<[2], [2], [1], [1], [0, 0, 0, 1, 1, 1], [0], [0]>} : vector<2x8x8xbf16>, vector<2x8x8xbf16>, vector<2x8x8xf32> -> vector<2x8x8xf32>
    "tpu.trace_stop"() : () -> ()
    %cst_67 = arith.constant 0.353553385 : f32
    %241 = vector.broadcast %cst_67 : f32 to vector<2x8x8xf32>
    %242 = arith.mulf %240, %241 : vector<2x8x8xf32>
    %243 = arith.addf %242, %7 : vector<2x8x8xf32>
    %cst_68 = arith.constant dense<0xFF800000> : vector<2x8xf32>
    %244 = vector.multi_reduction <maximumf>, %243, %cst_68 [2] : vector<2x8x8xf32> to vector<2x8xf32>
    %245 = vector.shape_cast %244 : vector<2x8xf32> to vector<2x8x1xf32>
    %246 = vector.broadcast %245 : vector<2x8x1xf32> to vector<2x8x8xf32>
    %247 = arith.subf %243, %246 : vector<2x8x8xf32>
    %248 = math.exp %247 : vector<2x8x8xf32>
    %cst_69 = arith.constant dense<0.000000e+00> : vector<2x8xf32>
    %249 = vector.multi_reduction <add>, %248, %cst_69 [2] : vector<2x8x8xf32> to vector<2x8xf32>
    %250 = vector.shape_cast %249 : vector<2x8xf32> to vector<2x8x1xf32>
    %251 = tpu.reciprocal %250 {approx = true} : vector<2x8x1xf32> -> vector<2x8x1xf32>
    %252 = vector.broadcast %251 : vector<2x8x1xf32> to vector<2x8x8xf32>
    %253 = arith.mulf %248, %252 : vector<2x8x8xf32>
    %254 = arith.truncf %253 : vector<2x8x8xf32> to vector<2x8x8xbf16>
    %255 = vector.extract_strided_slice %218 {offsets = [0, 0, 8], sizes = [2, 8, 8], strides = [1, 1, 1]} : vector<2x8x32xbf16> to vector<2x8x8xbf16>
    "tpu.trace_start"() <{level = 10 : i32, message = "bqk,bkd->bqd"}> : () -> ()
    %cst_70 = arith.constant dense<0.000000e+00> : vector<2x8x8xf32>
    %256 = tpu.matmul %254, %255, %cst_70 {dimension_numbers = #tpu.dot_dimension_numbers<[2], [1], [1], [2], [0, 0, 0, 1, 1, 2], [0], [0]>} : vector<2x8x8xbf16>, vector<2x8x8xbf16>, vector<2x8x8xf32> -> vector<2x8x8xf32>
    "tpu.trace_stop"() : () -> ()
    %257 = vector.extract_strided_slice %212 {offsets = [0, 0, 16], sizes = [2, 8, 8], strides = [1, 1, 1]} : vector<2x8x32xbf16> to vector<2x8x8xbf16>
    %258 = vector.extract_strided_slice %215 {offsets = [0, 0, 16], sizes = [2, 8, 8], strides = [1, 1, 1]} : vector<2x8x32xbf16> to vector<2x8x8xbf16>
    "tpu.trace_start"() <{level = 10 : i32, message = "bqd,bkd->bqk"}> : () -> ()
    %cst_71 = arith.constant dense<0.000000e+00> : vector<2x8x8xf32>
    %259 = tpu.matmul %257, %258, %cst_71 {dimension_numbers = #tpu.dot_dimension_numbers<[2], [2], [1], [1], [0, 0, 0, 1, 1, 1], [0], [0]>} : vector<2x8x8xbf16>, vector<2x8x8xbf16>, vector<2x8x8xf32> -> vector<2x8x8xf32>
    "tpu.trace_stop"() : () -> ()
    %cst_72 = arith.constant 0.353553385 : f32
    %260 = vector.broadcast %cst_72 : f32 to vector<2x8x8xf32>
    %261 = arith.mulf %259, %260 : vector<2x8x8xf32>
    %262 = arith.addf %261, %7 : vector<2x8x8xf32>
    %cst_73 = arith.constant dense<0xFF800000> : vector<2x8xf32>
    %263 = vector.multi_reduction <maximumf>, %262, %cst_73 [2] : vector<2x8x8xf32> to vector<2x8xf32>
    %264 = vector.shape_cast %263 : vector<2x8xf32> to vector<2x8x1xf32>
    %265 = vector.broadcast %264 : vector<2x8x1xf32> to vector<2x8x8xf32>
    %266 = arith.subf %262, %265 : vector<2x8x8xf32>
    %267 = math.exp %266 : vector<2x8x8xf32>
    %cst_74 = arith.constant dense<0.000000e+00> : vector<2x8xf32>
    %268 = vector.multi_reduction <add>, %267, %cst_74 [2] : vector<2x8x8xf32> to vector<2x8xf32>
    %269 = vector.shape_cast %268 : vector<2x8xf32> to vector<2x8x1xf32>
    %270 = tpu.reciprocal %269 {approx = true} : vector<2x8x1xf32> -> vector<2x8x1xf32>
    %271 = vector.broadcast %270 : vector<2x8x1xf32> to vector<2x8x8xf32>
    %272 = arith.mulf %267, %271 : vector<2x8x8xf32>
    %273 = arith.truncf %272 : vector<2x8x8xf32> to vector<2x8x8xbf16>
    %274 = vector.extract_strided_slice %218 {offsets = [0, 0, 16], sizes = [2, 8, 8], strides = [1, 1, 1]} : vector<2x8x32xbf16> to vector<2x8x8xbf16>
    "tpu.trace_start"() <{level = 10 : i32, message = "bqk,bkd->bqd"}> : () -> ()
    %cst_75 = arith.constant dense<0.000000e+00> : vector<2x8x8xf32>
    %275 = tpu.matmul %273, %274, %cst_75 {dimension_numbers = #tpu.dot_dimension_numbers<[2], [1], [1], [2], [0, 0, 0, 1, 1, 2], [0], [0]>} : vector<2x8x8xbf16>, vector<2x8x8xbf16>, vector<2x8x8xf32> -> vector<2x8x8xf32>
    "tpu.trace_stop"() : () -> ()
    %276 = vector.extract_strided_slice %212 {offsets = [0, 0, 24], sizes = [2, 8, 8], strides = [1, 1, 1]} : vector<2x8x32xbf16> to vector<2x8x8xbf16>
    %277 = vector.extract_strided_slice %215 {offsets = [0, 0, 24], sizes = [2, 8, 8], strides = [1, 1, 1]} : vector<2x8x32xbf16> to vector<2x8x8xbf16>
    "tpu.trace_start"() <{level = 10 : i32, message = "bqd,bkd->bqk"}> : () -> ()
    %cst_76 = arith.constant dense<0.000000e+00> : vector<2x8x8xf32>
    %278 = tpu.matmul %276, %277, %cst_76 {dimension_numbers = #tpu.dot_dimension_numbers<[2], [2], [1], [1], [0, 0, 0, 1, 1, 1], [0], [0]>} : vector<2x8x8xbf16>, vector<2x8x8xbf16>, vector<2x8x8xf32> -> vector<2x8x8xf32>
    "tpu.trace_stop"() : () -> ()
    %cst_77 = arith.constant 0.353553385 : f32
    %279 = vector.broadcast %cst_77 : f32 to vector<2x8x8xf32>
    %280 = arith.mulf %278, %279 : vector<2x8x8xf32>
    %281 = arith.addf %280, %7 : vector<2x8x8xf32>
    %cst_78 = arith.constant dense<0xFF800000> : vector<2x8xf32>
    %282 = vector.multi_reduction <maximumf>, %281, %cst_78 [2] : vector<2x8x8xf32> to vector<2x8xf32>
    %283 = vector.shape_cast %282 : vector<2x8xf32> to vector<2x8x1xf32>
    %284 = vector.broadcast %283 : vector<2x8x1xf32> to vector<2x8x8xf32>
    %285 = arith.subf %281, %284 : vector<2x8x8xf32>
    %286 = math.exp %285 : vector<2x8x8xf32>
    %cst_79 = arith.constant dense<0.000000e+00> : vector<2x8xf32>
    %287 = vector.multi_reduction <add>, %286, %cst_79 [2] : vector<2x8x8xf32> to vector<2x8xf32>
    %288 = vector.shape_cast %287 : vector<2x8xf32> to vector<2x8x1xf32>
    %289 = tpu.reciprocal %288 {approx = true} : vector<2x8x1xf32> -> vector<2x8x1xf32>
    %290 = vector.broadcast %289 : vector<2x8x1xf32> to vector<2x8x8xf32>
    %291 = arith.mulf %286, %290 : vector<2x8x8xf32>
    %292 = arith.truncf %291 : vector<2x8x8xf32> to vector<2x8x8xbf16>
    %293 = vector.extract_strided_slice %218 {offsets = [0, 0, 24], sizes = [2, 8, 8], strides = [1, 1, 1]} : vector<2x8x32xbf16> to vector<2x8x8xbf16>
    "tpu.trace_start"() <{level = 10 : i32, message = "bqk,bkd->bqd"}> : () -> ()
    %cst_80 = arith.constant dense<0.000000e+00> : vector<2x8x8xf32>
    %294 = tpu.matmul %292, %293, %cst_80 {dimension_numbers = #tpu.dot_dimension_numbers<[2], [1], [1], [2], [0, 0, 0, 1, 1, 2], [0], [0]>} : vector<2x8x8xbf16>, vector<2x8x8xbf16>, vector<2x8x8xf32> -> vector<2x8x8xf32>
    "tpu.trace_stop"() : () -> ()
    %295 = tpu.concatenate %237, %256, %275, %294 in 2 : vector<2x8x8xf32>, vector<2x8x8xf32>, vector<2x8x8xf32>, vector<2x8x8xf32> -> vector<2x8x32xf32>
    %296 = vector.shape_cast %295 : vector<2x8x32xf32> to vector<16x32xf32>
    %297 = arith.truncf %296 : vector<16x32xf32> to vector<16x32xbf16>
    %cst_81 = arith.constant dense<0.000000e+00> : vector<16x32xf32>
    %298 = tpu.matmul %297, %194, %cst_81 {dimension_numbers = #tpu.dot_dimension_numbers<[1], [0], [0], [1], [0, 0, 1, 1], [], []>} : vector<16x32xbf16>, vector<32x32xbf16>, vector<16x32xf32> -> vector<16x32xf32>
    %299 = vector.broadcast %199 : vector<1x32xf32> to vector<16x32xf32>
    %300 = arith.addf %298, %299 : vector<16x32xf32>
    %301 = arith.addf %188, %300 : vector<16x32xf32>
    %cst_82 = arith.constant dense<0.000000e+00> : vector<16xf32>
    %302 = vector.multi_reduction <add>, %301, %cst_82 [1] : vector<16x32xf32> to vector<16xf32>
    %303 = vector.shape_cast %302 : vector<16xf32> to vector<16x1xf32>
    %cst_83 = arith.constant 3.200000e+01 : f32
    %304 = vector.broadcast %cst_83 : f32 to vector<16x1xf32>
    %305 = arith.divf %303, %304 : vector<16x1xf32>
    %306 = vector.broadcast %305 : vector<16x1xf32> to vector<16x32xf32>
    %307 = arith.subf %301, %306 : vector<16x32xf32>
    %308 = arith.mulf %307, %307 : vector<16x32xf32>
    %cst_84 = arith.constant dense<0.000000e+00> : vector<16xf32>
    %309 = vector.multi_reduction <add>, %308, %cst_84 [1] : vector<16x32xf32> to vector<16xf32>
    %310 = vector.shape_cast %309 : vector<16xf32> to vector<16x1xf32>
    %cst_85 = arith.constant 3.200000e+01 : f32
    %311 = vector.broadcast %cst_85 : f32 to vector<16x1xf32>
    %312 = arith.divf %310, %311 : vector<16x1xf32>
    %313 = vector.broadcast %305 : vector<16x1xf32> to vector<16x32xf32>
    %314 = arith.subf %301, %313 : vector<16x32xf32>
    %cst_86 = arith.constant 9.99999974E-6 : f32
    %315 = vector.broadcast %cst_86 : f32 to vector<16x1xf32>
    %316 = arith.addf %312, %315 : vector<16x1xf32>
    %317 = math.rsqrt %316 : vector<16x1xf32>
    %318 = vector.broadcast %317 : vector<16x1xf32> to vector<16x32xf32>
    %319 = arith.mulf %314, %318 : vector<16x32xf32>
    %320 = vector.broadcast %200 : vector<1x32xf32> to vector<16x32xf32>
    %321 = arith.mulf %319, %320 : vector<16x32xf32>
    %322 = vector.broadcast %201 : vector<1x32xf32> to vector<16x32xf32>
    %323 = arith.addf %321, %322 : vector<16x32xf32>
    %324 = arith.truncf %323 : vector<16x32xf32> to vector<16x32xbf16>
    %cst_87 = arith.constant dense<0.000000e+00> : vector<16x128xf32>
    %325 = tpu.matmul %324, %195, %cst_87 {dimension_numbers = #tpu.dot_dimension_numbers<[1], [0], [0], [1], [0, 0, 1, 1], [], []>} : vector<16x32xbf16>, vector<32x128xbf16>, vector<16x128xf32> -> vector<16x128xf32>
    %326 = vector.broadcast %202 : vector<1x128xf32> to vector<16x128xf32>
    %327 = arith.addf %325, %326 : vector<16x128xf32>
    %cst_88 = arith.constant 5.000000e-01 : f32
    %328 = vector.broadcast %cst_88 : f32 to vector<16x128xf32>
    %329 = arith.mulf %328, %327 : vector<16x128xf32>
    %cst_89 = arith.constant 4.471500e-02 : f32
    %330 = vector.broadcast %cst_89 : f32 to vector<16x128xf32>
    %331 = arith.mulf %330, %327 : vector<16x128xf32>
    %332 = arith.mulf %331, %327 : vector<16x128xf32>
    %333 = arith.mulf %332, %327 : vector<16x128xf32>
    %334 = arith.addf %327, %333 : vector<16x128xf32>
    %cst_90 = arith.constant 0.797884583 : f32
    %335 = vector.broadcast %cst_90 : f32 to vector<16x128xf32>
    %336 = arith.mulf %335, %334 : vector<16x128xf32>
    %337 = math.tanh %336 : vector<16x128xf32>
    %cst_91 = arith.constant 1.000000e+00 : f32
    %338 = vector.broadcast %cst_91 : f32 to vector<16x128xf32>
    %339 = arith.addf %338, %337 : vector<16x128xf32>
    %340 = arith.mulf %329, %339 : vector<16x128xf32>
    %341 = arith.truncf %340 : vector<16x128xf32> to vector<16x128xbf16>
    %cst_92 = arith.constant dense<0.000000e+00> : vector<16x32xf32>
    %342 = tpu.matmul %341, %197, %cst_92 {dimension_numbers = #tpu.dot_dimension_numbers<[1], [0], [0], [1], [0, 0, 1, 1], [], []>} : vector<16x128xbf16>, vector<128x32xbf16>, vector<16x32xf32> -> vector<16x32xf32>
    %343 = vector.broadcast %203 : vector<1x32xf32> to vector<16x32xf32>
    %344 = arith.addf %342, %343 : vector<16x32xf32>
    %345 = arith.addf %323, %344 : vector<16x32xf32>
    %cst_93 = arith.constant dense<0.000000e+00> : vector<16xf32>
    %346 = vector.multi_reduction <add>, %345, %cst_93 [1] : vector<16x32xf32> to vector<16xf32>
    %347 = vector.shape_cast %346 : vector<16xf32> to vector<16x1xf32>
    %cst_94 = arith.constant 3.200000e+01 : f32
    %348 = vector.broadcast %cst_94 : f32 to vector<16x1xf32>
    %349 = arith.divf %347, %348 : vector<16x1xf32>
    %350 = vector.broadcast %349 : vector<16x1xf32> to vector<16x32xf32>
    %351 = arith.subf %345, %350 : vector<16x32xf32>
    %352 = arith.mulf %351, %351 : vector<16x32xf32>
    %cst_95 = arith.constant dense<0.000000e+00> : vector<16xf32>
    %353 = vector.multi_reduction <add>, %352, %cst_95 [1] : vector<16x32xf32> to vector<16xf32>
    %354 = vector.shape_cast %353 : vector<16xf32> to vector<16x1xf32>
    %cst_96 = arith.constant 3.200000e+01 : f32
    %355 = vector.broadcast %cst_96 : f32 to vector<16x1xf32>
    %356 = arith.divf %354, %355 : vector<16x1xf32>
    %357 = vector.broadcast %349 : vector<16x1xf32> to vector<16x32xf32>
    %358 = arith.subf %345, %357 : vector<16x32xf32>
    %cst_97 = arith.constant 9.99999974E-6 : f32
    %359 = vector.broadcast %cst_97 : f32 to vector<16x1xf32>
    %360 = arith.addf %356, %359 : vector<16x1xf32>
    %361 = math.rsqrt %360 : vector<16x1xf32>
    %362 = vector.broadcast %361 : vector<16x1xf32> to vector<16x32xf32>
    %363 = arith.mulf %358, %362 : vector<16x32xf32>
    %364 = vector.broadcast %204 : vector<1x32xf32> to vector<16x32xf32>
    %365 = arith.mulf %363, %364 : vector<16x32xf32>
    %366 = vector.broadcast %205 : vector<1x32xf32> to vector<16x32xf32>
    %367 = arith.addf %365, %366 : vector<16x32xf32>
    %c2 = arith.constant 2 : index
    %c0_98 = arith.constant 0 : index
    %c0_99 = arith.constant 0 : index
    %368 = vector.load %arg2[%c2, %c0_98, %c0_99] : memref<3x32x384xbf16, #tpu.memory_space<vmem>>, vector<1x32x384xbf16>
    %369 = vector.shape_cast %368 : vector<1x32x384xbf16> to vector<32x384xbf16>
    %c2_100 = arith.constant 2 : index
    %c0_101 = arith.constant 0 : index
    %c0_102 = arith.constant 0 : index
    %370 = vector.load %arg4[%c2_100, %c0_101, %c0_102] : memref<3x8x128xf32, #tpu.memory_space<vmem>>, vector<1x8x128xf32>
    %371 = vector.shape_cast %370 : vector<1x8x128xf32> to vector<8x128xf32>
    %372 = vector.extract_strided_slice %369 {offsets = [0, 0], sizes = [32, 32], strides = [1, 1]} : vector<32x384xbf16> to vector<32x32xbf16>
    %373 = vector.extract_strided_slice %369 {offsets = [0, 128], sizes = [32, 128], strides = [1, 1]} : vector<32x384xbf16> to vector<32x128xbf16>
    %374 = vector.extract_strided_slice %371 {offsets = [0, 0], sizes = [1, 32], strides = [1, 1]} : vector<8x128xf32> to vector<1x32xf32>
    %375 = vector.extract_strided_slice %371 {offsets = [1, 0], sizes = [1, 128], strides = [1, 1]} : vector<8x128xf32> to vector<1x128xf32>
    %376 = vector.shape_cast %367 : vector<16x32xf32> to vector<2x8x32xf32>
    %377 = vector.extract_strided_slice %376 {offsets = [0, 0, 0], sizes = [2, 1, 32], strides = [1, 1, 1]} : vector<2x8x32xf32> to vector<2x1x32xf32>
    %378 = vector.shape_cast %377 : vector<2x1x32xf32> to vector<2x32xf32>
    %379 = arith.truncf %378 : vector<2x32xf32> to vector<2x32xbf16>
    %cst_103 = arith.constant dense<0.000000e+00> : vector<2x32xf32>
    %380 = tpu.matmul %379, %372, %cst_103 {dimension_numbers = #tpu.dot_dimension_numbers<[1], [0], [0], [1], [0, 0, 1, 1], [], []>} : vector<2x32xbf16>, vector<32x32xbf16>, vector<2x32xf32> -> vector<2x32xf32>
    %381 = vector.broadcast %374 : vector<1x32xf32> to vector<2x32xf32>
    %382 = arith.addf %380, %381 : vector<2x32xf32>
    %383 = math.tanh %382 : vector<2x32xf32>
    %384 = arith.truncf %383 : vector<2x32xf32> to vector<2x32xbf16>
    %cst_104 = arith.constant dense<0.000000e+00> : vector<2x128xf32>
    %385 = tpu.matmul %384, %373, %cst_104 {dimension_numbers = #tpu.dot_dimension_numbers<[1], [0], [0], [1], [0, 0, 1, 1], [], []>} : vector<2x32xbf16>, vector<32x128xbf16>, vector<2x128xf32> -> vector<2x128xf32>
    %386 = vector.broadcast %375 : vector<1x128xf32> to vector<2x128xf32>
    %387 = arith.addf %385, %386 : vector<2x128xf32>
    %c0_105 = arith.constant 0 : index
    %c0_106 = arith.constant 0 : index
    %388 = vector.load %arg5[%c0_105, %c0_106] : memref<2x128xf32, #tpu.memory_space<vmem>>, vector<2x128xf32>
    tpu.vector_store %arg5[%c0_105, %c0_106], %387 {strides = array<i32>} : memref<2x128xf32, #tpu.memory_space<vmem>>, vector<2x128xf32>,
    return
  }
}

</mosaic_0001>

<llo_original>
// kernel: roberta_classifier_forward.1
$region0: #{roberta_classifier_forward.1}
  #allocation0 [shape = 'u32[]', space=smem, size = 0x4, offset = 0x4, fixed_abs, tag = 'smem constant byte address 0x4 - core index']
  #allocation1 [shape = 'u32[72,128]{1,0:T(1,128)}', space=vmem, size = 0x9000, scoped, tag = 'internal scratch']
  %s0 = inlined_call_operand.vmem [shape: f32[2,8,32], index: 0, kind: input, shape index: {}]
  %s1 = inlined_call_operand.hbm [shape: f32[2,8], index: 1, kind: input, shape index: {}]
  %s2 = inlined_call_operand.vmem [shape: bf16[3,32,384], index: 2, kind: input, shape index: {}]
  %s3 = inlined_call_operand.vmem [shape: bf16[2,128,32], index: 3, kind: input, shape index: {}]
  %s4 = inlined_call_operand.hbm [shape: f32[3,8,128], index: 4, kind: input, shape index: {}]
  %s5 = inlined_call_operand.hbm [shape: f32[2,128], index: 5, kind: output, shape index: {}]
  %s6 = sld [smem:[#allocation0]]
  $region38: #{roberta_classifier_forward.1} parent=0
    _
  %s8 = ssub.s32 1, %s6
  %s9 = scalar_select 0, %s8, %s6
  $region1: #{roberta_classifier_forward.1} parent=0
    #allocation2 [shape = 'u8[1024]{0}', space=vmem, size = 0x400, scoped, tag = 'input window, operand 1, single buffered']
    #allocation3 [shape = 's32[1]{0}', space=sflag, size = 0x4, scoped, tag = 'scoped memory for roberta_classifier_forward.1']
    #allocation4 [shape = 's32[1]{0}', space=sflag, size = 0x4, scoped, tag = 'scoped memory for roberta_classifier_forward.1']
    #allocation5 [shape = 'u8[12288]{0}', space=vmem, size = 0x3000, scoped, tag = 'input window, operand 4, single buffered']
    #allocation6 [shape = 's32[1]{0}', space=sflag, size = 0x4, scoped, tag = 'scoped memory for roberta_classifier_forward.1']
    #allocation7 [shape = 'u8[1024]{0}', space=vmem, size = 0x400, scoped, tag = 'output window, operand 0, single buffered']
    %10 = vsyncpa [#allocation3], 0
    %11 = vsyncpa [#allocation6], 0
    %12 = vsyncpa [#allocation4], 0
    // Predicated region
    $region2: #{roberta_classifier_forward.1} parent=1 // pred_check
      _
    $region3: #{roberta_classifier_forward.1} parent=1 // pred_check_branch
      %14 = sbr.rel (0) target = $region5
    $region4: #{roberta_classifier_forward.1} parent=1 // pred_region
      _
    $region5: #{roberta_classifier_forward.1} parent=1 // pred_fallthru
      _
    // Predicated region
    $region6: #{roberta_classifier_forward.1} parent=1 // pred_check
      _
    $region7: #{roberta_classifier_forward.1} parent=1 // pred_check_branch
      %16 = sbr.rel (0) target = $region9
    $region8: #{roberta_classifier_forward.1} parent=1 // pred_region
      %18 = vsyncadd [#allocation3], 0
      %s20 = sshll.u32 %s1, 4
      %s21 = int_to_ptr.hbm [resolvable:$true] %s20
      %s22 = sshll.u32 [#allocation2], 4
      %s23 = int_to_ptr.vmem [resolvable:$true] %s22
      %25 = dma.hbm_to_vmem [thread:$0]  %s21, 32, %s23, [#allocation3]
    $region9: #{roberta_classifier_forward.1} parent=1 // pred_fallthru
      _
    // Predicated region
    $region10: #{roberta_classifier_forward.1} parent=1 // pred_check
      _
    $region11: #{roberta_classifier_forward.1} parent=1 // pred_check_branch
      %27 = sbr.rel (0) target = $region13
    $region12: #{roberta_classifier_forward.1} parent=1 // pred_region
      _
    $region13: #{roberta_classifier_forward.1} parent=1 // pred_fallthru
      _
    // Predicated region
    $region14: #{roberta_classifier_forward.1} parent=1 // pred_check
      _
    $region15: #{roberta_classifier_forward.1} parent=1 // pred_check_branch
      %29 = sbr.rel (0) target = $region17
    $region16: #{roberta_classifier_forward.1} parent=1 // pred_region
      _
    $region17: #{roberta_classifier_forward.1} parent=1 // pred_fallthru
      _
    // Predicated region
    $region18: #{roberta_classifier_forward.1} parent=1 // pred_check
      _
    $region19: #{roberta_classifier_forward.1} parent=1 // pred_check_branch
      %31 = sbr.rel (0) target = $region21
    $region20: #{roberta_classifier_forward.1} parent=1 // pred_region
      %33 = vsyncadd [#allocation6], 0
      %s34 = sshll.u32 %s4, 4
      %s35 = int_to_ptr.hbm [resolvable:$true] %s34
      %s36 = sshll.u32 [#allocation5], 4
      %s37 = int_to_ptr.vmem [resolvable:$true] %s36
      %42 = dma.hbm_to_vmem [thread:$0]  %s35, 384, %s37, [#allocation6], 128, 128, 8
    $region21: #{roberta_classifier_forward.1} parent=1 // pred_fallthru
      _
    // Predicated region
    $region22: #{roberta_classifier_forward.1} parent=1 // pred_check
      _
    $region23: #{roberta_classifier_forward.1} parent=1 // pred_check_branch
      %44 = sbr.rel (0) target = $region25
    $region24: #{roberta_classifier_forward.1} parent=1 // pred_region
      %46 = dma.done [#allocation3], 32
    $region25: #{roberta_classifier_forward.1} parent=1 // pred_fallthru
      _
    // Predicated region
    $region26: #{roberta_classifier_forward.1} parent=1 // pred_check
      _
    $region27: #{roberta_classifier_forward.1} parent=1 // pred_check_branch
      %48 = sbr.rel (0) target = $region29
    $region28: #{roberta_classifier_forward.1} parent=1 // pred_region
      %50 = dma.done [#allocation6], 384
    $region29: #{roberta_classifier_forward.1} parent=1 // pred_fallthru
      _
    %v52 = vld [vmem:[#allocation2] sm:$0x3]
    %v53 = vsub.f32 1.0, %v52
    %v54 = vmul.f32 %v53, -1e+09
    %v56 = vrot.slane %v54, 1
    %v57 = vperm.slane %v54, 0
    %v58 = vperm.slane %v56, 0
    %v61 = vld [vmem:[%s0] sm:$0xff]
    %v62 = vld [vmem:[%s0 + $0x8] sm:$0xff]
    %v63 = vld [vmem:[%s2] sm:$0xff]
    %v64 = vld [vmem:[%s2 + $0x8] sm:$0xf]
    %v65 = vld [vmem:[%s2 + $0xc] sm:$0xff]
    %v66 = vld [vmem:[%s2 + $0x14] sm:$0xf]
    %v67 = vld [vmem:[%s2 + $0x18] sm:$0xff]
    %v68 = vld [vmem:[%s2 + $0x20] sm:$0xf]
    %v69 = vld [vmem:[%s2 + $0x24] sm:$0xff]
    %v70 = vld [vmem:[%s2 + $0x2c] sm:$0xf]
    %v71 = vld [vmem:[#allocation5] sm:$0xff]
    %v72 = vld [vmem:[%s3] sm:$0xf]
    %v73 = vld [vmem:[%s3 + $0x4] sm:$0xf]
    %v74 = vld [vmem:[%s3 + $0x8] sm:$0xf]
    %v75 = vld [vmem:[%s3 + $0xc] sm:$0xf]
    %v76 = vld [vmem:[%s3 + $0x10] sm:$0xf]
    %v77 = vld [vmem:[%s3 + $0x14] sm:$0xf]
    %v78 = vld [vmem:[%s3 + $0x18] sm:$0xf]
    %v79 = vld [vmem:[%s3 + $0x1c] sm:$0xf]
    %v80 = vld [vmem:[%s3 + $0x20] sm:$0xf]
    %v81 = vld [vmem:[%s3 + $0x24] sm:$0xf]
    %v82 = vld [vmem:[%s3 + $0x28] sm:$0xf]
    %v83 = vld [vmem:[%s3 + $0x2c] sm:$0xf]
    %v84 = vld [vmem:[%s3 + $0x30] sm:$0xf]
    %v85 = vld [vmem:[%s3 + $0x34] sm:$0xf]
    %v86 = vld [vmem:[%s3 + $0x38] sm:$0xf]
    %v87 = vld [vmem:[%s3 + $0x3c] sm:$0xf]
    %v88 = vpack.c.bf16 %v62, %v61
    %v89 = vperm.slane %v71, 0
    %v94 = vunpack.c.l.b16 %v63
    %v95 = vunpack.c.l.b16 %v65
    %v96 = vunpack.c.l.b16 %v67
    %v97 = vunpack.c.l.b16 %v69
    %v98 = vpack.c.b16 %v95, %v94
    %v99 = vpack.c.b16 %v97, %v96
    %vm102 = vcmask 261120
    %v104 = vsel %vm102, %v88, 0
    %106 = vmatpush.bf16.msra.mxu0 0
    %107 = vmatpush.bf16.msra.mxu0 0
    %108 = vmatpush.bf16.msra.mxu0 0
    %109 = vmatpush.bf16.msra.mxu0 0
    %110 = vmatpush.bf16.msra.mxu0 0
    %111 = vmatpush.bf16.msra.mxu0 0
    %112 = vmatpush.bf16.msra.mxu0 %v99
    %113 = vmatpush.bf16.msra.mxu0 %v98
    %114 = vmatmul.bf16.gmra.mxu0 %v104
    %v115 = vpop.f32.mrf.mxu0
    %v116 = vadd.f32 %v89, %v115
    %v117 = vpop.f32.mrf.mxu0
    %v118 = vadd.f32 %v89, %v117
    %119 = vdwg.mxu0
    %v120 = vpack.c.bf16 %v116, %v116
    %v121 = vpack.c.bf16 %v118, %v118
    %v123 = vunpack.c.l.b16 %v120
    %v124 = vpack.c.b16 %v123, %v123
    %125 = vrot.lane.b32.xlu0 %v124, 96
    %v126 = vpop.permute.xlu0 %125
    %vm127 = vcmask 64512
    %v129 = vsel %vm127, %v120, 0
    %v132 = vsel %vm127, %v126, 0
    %134 = vmatpush.bf16.xpose.msra.mxu0 0
    %135 = vmatpush.bf16.xpose.msra.mxu0 0
    %136 = vmatpush.bf16.xpose.msra.mxu0 0
    %137 = vmatpush.bf16.xpose.msra.mxu0 0
    %138 = vmatpush.bf16.xpose.msra.mxu0 0
    %139 = vmatpush.bf16.xpose.msra.mxu0 0
    %140 = vmatpush.bf16.xpose.msra.mxu0 0
    %141 = vmatpush.bf16.xpose.msra.mxu0 %v132
    %142 = vmatmul.bf16.gmra.mxu0 %v129
    %v143 = vpop.f32.mrf.mxu0
    %v144 = vadd.f32 0.0, %v143
    %v145 = vpop.f32.mrf.mxu0
    %146 = vdwg.mxu0
    %v148 = vunpack.c.l.b16 %v121
    %v149 = vpack.c.b16 %v148, %v148
    %150 = vrot.lane.b32.xlu0 %v149, 96
    %v151 = vpop.permute.xlu0 %150
    %v153 = vsel %vm127, %v121, 0
    %v156 = vsel %vm127, %v151, 0
    %158 = vmatpush.bf16.xpose.msra.mxu0 0
    %159 = vmatpush.bf16.xpose.msra.mxu0 0
    %160 = vmatpush.bf16.xpose.msra.mxu0 0
    %161 = vmatpush.bf16.xpose.msra.mxu0 0
    %162 = vmatpush.bf16.xpose.msra.mxu0 0
    %163 = vmatpush.bf16.xpose.msra.mxu0 0
    %164 = vmatpush.bf16.xpose.msra.mxu0 0
    %165 = vmatpush.bf16.xpose.msra.mxu0 %v156
    %166 = vmatmul.bf16.gmra.mxu0 %v153
    %v167 = vpop.f32.mrf.mxu0
    %v168 = vadd.f32 0.0, %v167
    %v169 = vpop.f32.mrf.mxu0
    %170 = vdwg.mxu0
    %v171 = vmul.f32 %v144, 0.35355338
    %v172 = vmul.f32 %v168, 0.35355338
    %v173 = vadd.f32 %v171, %v57
    %v174 = vadd.f32 %v172, %v58
    %v175 = vsel %vm127, %v173, -inf
    %176 = vmax.xlane.f32.xlu0 %v175
    %v177 = vpop.xlane.xlu0 %176
    %v178 = vsel %vm127, %v174, -inf
    %179 = vmax.xlane.f32.xlu0 %v178
    %v180 = vpop.xlane.xlu0 %179
    %v181 = vsub.f32 %v173, %v177
    %v182 = vsub.f32 %v174, %v180
    %v183 = vmul.f32 %v181, 1.442695
    %v184 = vpow.pop %v183
    %v185 = vmul.f32 %v182, 1.442695
    %v186 = vpow.pop %v185
    %v187 = vsel %vm127, %v184, 0.0
    %188 = vadd.xlane.f32.xlu0 %v187
    %v189 = vpop.xlane.xlu0 %188
    %v190 = vsel %vm127, %v186, 0.0
    %191 = vadd.xlane.f32.xlu0 %v190
    %v192 = vpop.xlane.xlu0 %191
    %v193 = vrcp.pop %v189
    %v194 = vrcp.pop %v192
    %v195 = vmul.f32 %v184, %v193
    %v196 = vmul.f32 %v186, %v194
    %v197 = vpack.c.bf16 %v195, %v195
    %v198 = vpack.c.bf16 %v196, %v196
    %199 = vrot.lane.b32.xlu0 %v124, 64
    %v200 = vpop.permute.xlu0 %199
    %v202 = vsel %vm127, %v197, 0
    %vm204 = vcmask 1043456
    %v206 = vsel %vm204, %v200, 0
    %208 = vmatpush.bf16.msra.mxu0 0
    %209 = vmatpush.bf16.msra.mxu0 0
    %210 = vmatpush.bf16.msra.mxu0 0
    %211 = vmatpush.bf16.msra.mxu0 0
    %212 = vmatpush.bf16.msra.mxu0 0
    %213 = vmatpush.bf16.msra.mxu0 0
    %214 = vmatpush.bf16.msra.mxu0 0
    %215 = vmatpush.bf16.msra.mxu0 %v206
    %216 = vmatmul.bf16.gmra.mxu0 %v202
    %v217 = vpop.f32.mrf.mxu0
    %v218 = vadd.f32 0.0, %v217
    %v219 = vpop.f32.mrf.mxu0
    %220 = vdwg.mxu0
    %221 = vrot.lane.b32.xlu0 %v149, 64
    %v222 = vpop.permute.xlu0 %221
    %v224 = vsel %vm127, %v198, 0
    %v227 = vsel %vm204, %v222, 0
    %229 = vmatpush.bf16.msra.mxu0 0
    %230 = vmatpush.bf16.msra.mxu0 0
    %231 = vmatpush.bf16.msra.mxu0 0
    %232 = vmatpush.bf16.msra.mxu0 0
    %233 = vmatpush.bf16.msra.mxu0 0
    %234 = vmatpush.bf16.msra.mxu0 0
    %235 = vmatpush.bf16.msra.mxu0 0
    %236 = vmatpush.bf16.msra.mxu0 %v227
    %237 = vmatmul.bf16.gmra.mxu0 %v224
    %v238 = vpop.f32.mrf.mxu0
    %v239 = vadd.f32 0.0, %v238
    %v240 = vpop.f32.mrf.mxu0
    %241 = vdwg.mxu0
    %242 = vrot.lane.b32.xlu0 %v124, 120
    %v243 = vpop.permute.xlu0 %242
    %244 = vrot.lane.b32.xlu0 %v124, 88
    %v245 = vpop.permute.xlu0 %244
    %v247 = vsel %vm127, %v243, 0
    %v250 = vsel %vm127, %v245, 0
    %252 = vmatpush.bf16.xpose.msra.mxu0 0
    %253 = vmatpush.bf16.xpose.msra.mxu0 0
    %254 = vmatpush.bf16.xpose.msra.mxu0 0
    %255 = vmatpush.bf16.xpose.msra.mxu0 0
    %256 = vmatpush.bf16.xpose.msra.mxu0 0
    %257 = vmatpush.bf16.xpose.msra.mxu0 0
    %258 = vmatpush.bf16.xpose.msra.mxu0 0
    %259 = vmatpush.bf16.xpose.msra.mxu0 %v250
    %260 = vmatmul.bf16.gmra.mxu0 %v247
    %v261 = vpop.f32.mrf.mxu0
    %v262 = vadd.f32 0.0, %v261
    %v263 = vpop.f32.mrf.mxu0
    %264 = vdwg.mxu0
    %265 = vrot.lane.b32.xlu0 %v149, 120
    %v266 = vpop.permute.xlu0 %265
    %267 = vrot.lane.b32.xlu0 %v149, 88
    %v268 = vpop.permute.xlu0 %267
    %v270 = vsel %vm127, %v266, 0
    %v273 = vsel %vm127, %v268, 0
    %275 = vmatpush.bf16.xpose.msra.mxu0 0
    %276 = vmatpush.bf16.xpose.msra.mxu0 0
    %277 = vmatpush.bf16.xpose.msra.mxu0 0
    %278 = vmatpush.bf16.xpose.msra.mxu0 0
    %279 = vmatpush.bf16.xpose.msra.mxu0 0
    %280 = vmatpush.bf16.xpose.msra.mxu0 0
    %281 = vmatpush.bf16.xpose.msra.mxu0 0
    %282 = vmatpush.bf16.xpose.msra.mxu0 %v273
    %283 = vmatmul.bf16.gmra.mxu0 %v270
    %v284 = vpop.f32.mrf.mxu0
    %v285 = vadd.f32 0.0, %v284
    %v286 = vpop.f32.mrf.mxu0
    %287 = vdwg.mxu0
    %v288 = vmul.f32 %v262, 0.35355338
    %v289 = vmul.f32 %v285, 0.35355338
    %v290 = vadd.f32 %v288, %v57
    %v291 = vadd.f32 %v289, %v58
    %v292 = vsel %vm127, %v290, -inf
    %293 = vmax.xlane.f32.xlu0 %v292
    %v294 = vpop.xlane.xlu0 %293
    %v295 = vsel %vm127, %v291, -inf
    %296 = vmax.xlane.f32.xlu0 %v295
    %v297 = vpop.xlane.xlu0 %296
    %v298 = vsub.f32 %v290, %v294
    %v299 = vsub.f32 %v291, %v297
    %v300 = vmul.f32 %v298, 1.442695
    %v301 = vpow.pop %v300
    %v302 = vmul.f32 %v299, 1.442695
    %v303 = vpow.pop %v302
    %v304 = vsel %vm127, %v301, 0.0
    %305 = vadd.xlane.f32.xlu0 %v304
    %v306 = vpop.xlane.xlu0 %305
    %v307 = vsel %vm127, %v303, 0.0
    %308 = vadd.xlane.f32.xlu0 %v307
    %v309 = vpop.xlane.xlu0 %308
    %v310 = vrcp.pop %v306
    %v311 = vrcp.pop %v309
    %v312 = vmul.f32 %v301, %v310
    %v313 = vmul.f32 %v303, %v311
    %v314 = vpack.c.bf16 %v312, %v312
    %v315 = vpack.c.bf16 %v313, %v313
    %316 = vrot.lane.b32.xlu0 %v124, 56
    %v317 = vpop.permute.xlu0 %316
    %v319 = vsel %vm127, %v314, 0
    %v322 = vsel %vm204, %v317, 0
    %324 = vmatpush.bf16.msra.mxu0 0
    %325 = vmatpush.bf16.msra.mxu0 0
    %326 = vmatpush.bf16.msra.mxu0 0
    %327 = vmatpush.bf16.msra.mxu0 0
    %328 = vmatpush.bf16.msra.mxu0 0
    %329 = vmatpush.bf16.msra.mxu0 0
    %330 = vmatpush.bf16.msra.mxu0 0
    %331 = vmatpush.bf16.msra.mxu0 %v322
    %332 = vmatmul.bf16.gmra.mxu0 %v319
    %v333 = vpop.f32.mrf.mxu0
    %v334 = vadd.f32 0.0, %v333
    %v335 = vpop.f32.mrf.mxu0
    %336 = vdwg.mxu0
    %337 = vrot.lane.b32.xlu0 %v149, 56
    %v338 = vpop.permute.xlu0 %337
    %v340 = vsel %vm127, %v315, 0
    %v343 = vsel %vm204, %v338, 0
    %345 = vmatpush.bf16.msra.mxu0 0
    %346 = vmatpush.bf16.msra.mxu0 0
    %347 = vmatpush.bf16.msra.mxu0 0
    %348 = vmatpush.bf16.msra.mxu0 0
    %349 = vmatpush.bf16.msra.mxu0 0
    %350 = vmatpush.bf16.msra.mxu0 0
    %351 = vmatpush.bf16.msra.mxu0 0
    %352 = vmatpush.bf16.msra.mxu0 %v343
    %353 = vmatmul.bf16.gmra.mxu0 %v340
    %v354 = vpop.f32.mrf.mxu0
    %v355 = vadd.f32 0.0, %v354
    %v356 = vpop.f32.mrf.mxu0
    %357 = vdwg.mxu0
    %358 = vrot.lane.b32.xlu0 %v124, 112
    %v359 = vpop.permute.xlu0 %358
    %360 = vrot.lane.b32.xlu0 %v124, 80
    %v361 = vpop.permute.xlu0 %360
    %v363 = vsel %vm127, %v359, 0
    %v366 = vsel %vm127, %v361, 0
    %368 = vmatpush.bf16.xpose.msra.mxu0 0
    %369 = vmatpush.bf16.xpose.msra.mxu0 0
    %370 = vmatpush.bf16.xpose.msra.mxu0 0
    %371 = vmatpush.bf16.xpose.msra.mxu0 0
    %372 = vmatpush.bf16.xpose.msra.mxu0 0
    %373 = vmatpush.bf16.xpose.msra.mxu0 0
    %374 = vmatpush.bf16.xpose.msra.mxu0 0
    %375 = vmatpush.bf16.xpose.msra.mxu0 %v366
    %376 = vmatmul.bf16.gmra.mxu0 %v363
    %v377 = vpop.f32.mrf.mxu0
    %v378 = vadd.f32 0.0, %v377
    %v379 = vpop.f32.mrf.mxu0
    %380 = vdwg.mxu0
    %381 = vrot.lane.b32.xlu0 %v149, 112
    %v382 = vpop.permute.xlu0 %381
    %383 = vrot.lane.b32.xlu0 %v149, 80
    %v384 = vpop.permute.xlu0 %383
    %v386 = vsel %vm127, %v382, 0
    %v389 = vsel %vm127, %v384, 0
    %391 = vmatpush.bf16.xpose.msra.mxu0 0
    %392 = vmatpush.bf16.xpose.msra.mxu0 0
    %393 = vmatpush.bf16.xpose.msra.mxu0 0
    %394 = vmatpush.bf16.xpose.msra.mxu0 0
    %395 = vmatpush.bf16.xpose.msra.mxu0 0
    %396 = vmatpush.bf16.xpose.msra.mxu0 0
    %397 = vmatpush.bf16.xpose.msra.mxu0 0
    %398 = vmatpush.bf16.xpose.msra.mxu0 %v389
    %399 = vmatmul.bf16.gmra.mxu0 %v386
    %v400 = vpop.f32.mrf.mxu0
    %v401 = vadd.f32 0.0, %v400
    %v402 = vpop.f32.mrf.mxu0
    %403 = vdwg.mxu0
    %v404 = vmul.f32 %v378, 0.35355338
    %v405 = vmul.f32 %v401, 0.35355338
    %v406 = vadd.f32 %v404, %v57
    %v407 = vadd.f32 %v405, %v58
    %v408 = vsel %vm127, %v406, -inf
    %409 = vmax.xlane.f32.xlu0 %v408
    %v410 = vpop.xlane.xlu0 %409
    %v411 = vsel %vm127, %v407, -inf
    %412 = vmax.xlane.f32.xlu0 %v411
    %v413 = vpop.xlane.xlu0 %412
    %v414 = vsub.f32 %v406, %v410
    %v415 = vsub.f32 %v407, %v413
    %v416 = vmul.f32 %v414, 1.442695
    %v417 = vpow.pop %v416
    %v418 = vmul.f32 %v415, 1.442695
    %v419 = vpow.pop %v418
    %v420 = vsel %vm127, %v417, 0.0
    %421 = vadd.xlane.f32.xlu0 %v420
    %v422 = vpop.xlane.xlu0 %421
    %v423 = vsel %vm127, %v419, 0.0
    %424 = vadd.xlane.f32.xlu0 %v423
    %v425 = vpop.xlane.xlu0 %424
    %v426 = vrcp.pop %v422
    %v427 = vrcp.pop %v425
    %v428 = vmul.f32 %v417, %v426
    %v429 = vmul.f32 %v419, %v427
    %v430 = vpack.c.bf16 %v428, %v428
    %v431 = vpack.c.bf16 %v429, %v429
    %432 = vrot.lane.b32.xlu0 %v124, 48
    %v433 = vpop.permute.xlu0 %432
    %v435 = vsel %vm127, %v430, 0
    %v438 = vsel %vm204, %v433, 0
    %440 = vmatpush.bf16.msra.mxu0 0
    %441 = vmatpush.bf16.msra.mxu0 0
    %442 = vmatpush.bf16.msra.mxu0 0
    %443 = vmatpush.bf16.msra.mxu0 0
    %444 = vmatpush.bf16.msra.mxu0 0
    %445 = vmatpush.bf16.msra.mxu0 0
    %446 = vmatpush.bf16.msra.mxu0 0
    %447 = vmatpush.bf16.msra.mxu0 %v438
    %448 = vmatmul.bf16.gmra.mxu0 %v435
    %v449 = vpop.f32.mrf.mxu0
    %v450 = vadd.f32 0.0, %v449
    %v451 = vpop.f32.mrf.mxu0
    %452 = vdwg.mxu0
    %453 = vrot.lane.b32.xlu0 %v149, 48
    %v454 = vpop.permute.xlu0 %453
    %v456 = vsel %vm127, %v431, 0
    %v459 = vsel %vm204, %v454, 0
    %461 = vmatpush.bf16.msra.mxu0 0
    %462 = vmatpush.bf16.msra.mxu0 0
    %463 = vmatpush.bf16.msra.mxu0 0
    %464 = vmatpush.bf16.msra.mxu0 0
    %465 = vmatpush.bf16.msra.mxu0 0
    %466 = vmatpush.bf16.msra.mxu0 0
    %467 = vmatpush.bf16.msra.mxu0 0
    %468 = vmatpush.bf16.msra.mxu0 %v459
    %469 = vmatmul.bf16.gmra.mxu0 %v456
    %v470 = vpop.f32.mrf.mxu0
    %v471 = vadd.f32 0.0, %v470
    %v472 = vpop.f32.mrf.mxu0
    %473 = vdwg.mxu0
    %474 = vrot.lane.b32.xlu0 %v124, 104
    %v475 = vpop.permute.xlu0 %474
    %476 = vrot.lane.b32.xlu0 %v124, 72
    %v477 = vpop.permute.xlu0 %476
    %v479 = vsel %vm127, %v475, 0
    %v482 = vsel %vm127, %v477, 0
    %484 = vmatpush.bf16.xpose.msra.mxu0 0
    %485 = vmatpush.bf16.xpose.msra.mxu0 0
    %486 = vmatpush.bf16.xpose.msra.mxu0 0
    %487 = vmatpush.bf16.xpose.msra.mxu0 0
    %488 = vmatpush.bf16.xpose.msra.mxu0 0
    %489 = vmatpush.bf16.xpose.msra.mxu0 0
    %490 = vmatpush.bf16.xpose.msra.mxu0 0
    %491 = vmatpush.bf16.xpose.msra.mxu0 %v482
    %492 = vmatmul.bf16.gmra.mxu0 %v479
    %v493 = vpop.f32.mrf.mxu0
    %v494 = vadd.f32 0.0, %v493
    %v495 = vpop.f32.mrf.mxu0
    %496 = vdwg.mxu0
    %497 = vrot.lane.b32.xlu0 %v149, 104
    %v498 = vpop.permute.xlu0 %497
    %499 = vrot.lane.b32.xlu0 %v149, 72
    %v500 = vpop.permute.xlu0 %499
    %v502 = vsel %vm127, %v498, 0
    %v505 = vsel %vm127, %v500, 0
    %507 = vmatpush.bf16.xpose.msra.mxu0 0
    %508 = vmatpush.bf16.xpose.msra.mxu0 0
    %509 = vmatpush.bf16.xpose.msra.mxu0 0
    %510 = vmatpush.bf16.xpose.msra.mxu0 0
    %511 = vmatpush.bf16.xpose.msra.mxu0 0
    %512 = vmatpush.bf16.xpose.msra.mxu0 0
    %513 = vmatpush.bf16.xpose.msra.mxu0 0
    %514 = vmatpush.bf16.xpose.msra.mxu0 %v505
    %515 = vmatmul.bf16.gmra.mxu0 %v502
    %v516 = vpop.f32.mrf.mxu0
    %v517 = vadd.f32 0.0, %v516
    %v518 = vpop.f32.mrf.mxu0
    %519 = vdwg.mxu0
    %v520 = vmul.f32 %v494, 0.35355338
    %v521 = vmul.f32 %v517, 0.35355338
    %v522 = vadd.f32 %v520, %v57
    %v523 = vadd.f32 %v521, %v58
    %v524 = vsel %vm127, %v522, -inf
    %525 = vmax.xlane.f32.xlu0 %v524
    %v526 = vpop.xlane.xlu0 %525
    %v527 = vsel %vm127, %v523, -inf
    %528 = vmax.xlane.f32.xlu0 %v527
    %v529 = vpop.xlane.xlu0 %528
    %v530 = vsub.f32 %v522, %v526
    %v531 = vsub.f32 %v523, %v529
    %v532 = vmul.f32 %v530, 1.442695
    %v533 = vpow.pop %v532
    %v534 = vmul.f32 %v531, 1.442695
    %v535 = vpow.pop %v534
    %v536 = vsel %vm127, %v533, 0.0
    %537 = vadd.xlane.f32.xlu0 %v536
    %v538 = vpop.xlane.xlu0 %537
    %v539 = vsel %vm127, %v535, 0.0
    %540 = vadd.xlane.f32.xlu0 %v539
    %v541 = vpop.xlane.xlu0 %540
    %v542 = vrcp.pop %v538
    %v543 = vrcp.pop %v541
    %v544 = vmul.f32 %v533, %v542
    %v545 = vmul.f32 %v535, %v543
    %v546 = vpack.c.bf16 %v544, %v544
    %v547 = vpack.c.bf16 %v545, %v545
    %548 = vrot.lane.b32.xlu0 %v124, 40
    %v549 = vpop.permute.xlu0 %548
    %v551 = vsel %vm127, %v546, 0
    %v554 = vsel %vm204, %v549, 0
    %556 = vmatpush.bf16.msra.mxu0 0
    %557 = vmatpush.bf16.msra.mxu0 0
    %558 = vmatpush.bf16.msra.mxu0 0
    %559 = vmatpush.bf16.msra.mxu0 0
    %560 = vmatpush.bf16.msra.mxu0 0
    %561 = vmatpush.bf16.msra.mxu0 0
    %562 = vmatpush.bf16.msra.mxu0 0
    %563 = vmatpush.bf16.msra.mxu0 %v554
    %564 = vmatmul.bf16.gmra.mxu0 %v551
    %v565 = vpop.f32.mrf.mxu0
    %v566 = vadd.f32 0.0, %v565
    %v567 = vpop.f32.mrf.mxu0
    %568 = vdwg.mxu0
    %569 = vrot.lane.b32.xlu0 %v149, 40
    %v570 = vpop.permute.xlu0 %569
    %v572 = vsel %vm127, %v547, 0
    %v575 = vsel %vm204, %v570, 0
    %577 = vmatpush.bf16.msra.mxu0 0
    %578 = vmatpush.bf16.msra.mxu0 0
    %579 = vmatpush.bf16.msra.mxu0 0
    %580 = vmatpush.bf16.msra.mxu0 0
    %581 = vmatpush.bf16.msra.mxu0 0
    %582 = vmatpush.bf16.msra.mxu0 0
    %583 = vmatpush.bf16.msra.mxu0 0
    %584 = vmatpush.bf16.msra.mxu0 %v575
    %585 = vmatmul.bf16.gmra.mxu0 %v572
    %v586 = vpop.f32.mrf.mxu0
    %v587 = vadd.f32 0.0, %v586
    %v588 = vpop.f32.mrf.mxu0
    %589 = vdwg.mxu0
    %592 = vrot.lane.b32.xlu0 %v334, 8
    %v593 = vpop.permute.xlu0 %592
    %594 = vrot.lane.b32.xlu0 %v355, 8
    %v595 = vpop.permute.xlu0 %594
    %600 = vrot.lane.b32.xlu0 %v450, 16
    %v601 = vpop.permute.xlu0 %600
    %602 = vrot.lane.b32.xlu0 %v471, 16
    %v603 = vpop.permute.xlu0 %602
    %608 = vrot.lane.b32.xlu0 %v566, 24
    %v609 = vpop.permute.xlu0 %608
    %610 = vrot.lane.b32.xlu0 %v587, 24
    %v611 = vpop.permute.xlu0 %610
    %v614 = vsel %vm127, %v218, %v593
    %v615 = vsel %vm127, %v239, %v595
    %vm616 = vcmask 130048
    %v617 = vsel %vm616, %v614, %v601
    %v618 = vsel %vm616, %v615, %v603
    %vm619 = vcmask 195584
    %v620 = vsel %vm619, %v617, %v609
    %v621 = vsel %vm619, %v618, %v611
    %v622 = vpack.c.bf16 %v621, %v620
    %v623 = vperm.slane %v71, 1
    %v624 = vunpack.c.h.b16 %v63
    %v625 = vunpack.c.h.b16 %v65
    %v626 = vunpack.c.h.b16 %v67
    %v627 = vunpack.c.h.b16 %v69
    %v628 = vpack.c.b16 %v625, %v624
    %v629 = vpack.c.b16 %v627, %v626
    %v633 = vsel %vm102, %v622, 0
    %635 = vmatpush.bf16.msra.mxu0 0
    %636 = vmatpush.bf16.msra.mxu0 0
    %637 = vmatpush.bf16.msra.mxu0 0
    %638 = vmatpush.bf16.msra.mxu0 0
    %639 = vmatpush.bf16.msra.mxu0 0
    %640 = vmatpush.bf16.msra.mxu0 0
    %641 = vmatpush.bf16.msra.mxu0 %v629
    %642 = vmatpush.bf16.msra.mxu0 %v628
    %643 = vmatmul.bf16.gmra.mxu0 %v633
    %v644 = vpop.f32.mrf.mxu0
    %v645 = vadd.f32 %v623, %v644
    %v646 = vpop.f32.mrf.mxu0
    %v647 = vadd.f32 %v623, %v646
    %648 = vdwg.mxu0
    %v649 = vadd.f32 %v61, %v645
    %v650 = vadd.f32 %v62, %v647
    %v651 = vsel %vm102, %v649, 0.0
    %652 = vadd.xlane.f32.xlu0 %v651
    %v653 = vpop.xlane.xlu0 %652
    %v654 = vsel %vm102, %v650, 0.0
    %655 = vadd.xlane.f32.xlu0 %v654
    %v656 = vpop.xlane.xlu0 %655
    %v657 = vrcp.pop 32.0
    %v658 = vmul.f32 32.0, %v657
    %v659 = vsub.f32 1.0, %v658
    %v660 = vmul.f32 %v657, %v659
    %v661 = vadd.f32 %v657, %v660
    %vm662 = vweird.f32 %v657
    %v663 = vsel %vm662, %v657, %v661
    %v664 = vmul.f32 %v653, %v663
    %v665 = vmul.f32 %v656, %v663
    %v666 = vsub.f32 %v649, %v664
    %v667 = vsub.f32 %v650, %v665
    %v668 = vmul.f32 %v666, %v666
    %v669 = vmul.f32 %v667, %v667
    %v670 = vsel %vm102, %v668, 0.0
    %671 = vadd.xlane.f32.xlu0 %v670
    %v672 = vpop.xlane.xlu0 %671
    %v673 = vsel %vm102, %v669, 0.0
    %674 = vadd.xlane.f32.xlu0 %v673
    %v675 = vpop.xlane.xlu0 %674
    %v676 = vmul.f32 %v672, %v663
    %v677 = vmul.f32 %v675, %v663
    %v678 = vadd.f32 %v676, 1e-05
    %v679 = vadd.f32 %v677, 1e-05
    %v680 = vrsqrt.pop %v678
    %v681 = vmul.f32 %v680, %v678
    %v682 = vmul.f32 %v681, %v680
    %v683 = vmul.f32 0.5, %v682
    %v684 = vsub.f32 1.5, %v683
    %v685 = vmul.f32 %v680, %v684
    %vm686 = vweird.f32 %v678
    %vm687 = vweird.f32 %v680
    %vm688 = vmor %vm686, %vm687
    %v689 = vsel %vm688, %v680, %v685
    %v690 = vrsqrt.pop %v679
    %v691 = vmul.f32 %v690, %v679
    %v692 = vmul.f32 %v691, %v690
    %v693 = vmul.f32 0.5, %v692
    %v694 = vsub.f32 1.5, %v693
    %v695 = vmul.f32 %v690, %v694
    %vm696 = vweird.f32 %v679
    %vm697 = vweird.f32 %v690
    %vm698 = vmor %vm696, %vm697
    %v699 = vsel %vm698, %v690, %v695
    %v700 = vmul.f32 %v666, %v689
    %v701 = vmul.f32 %v667, %v699
    %v702 = vperm.slane %v71, 2
    %v703 = vmul.f32 %v700, %v702
    %v704 = vmul.f32 %v701, %v702
    %v705 = vperm.slane %v71, 3
    %v706 = vadd.f32 %v703, %v705
    %v707 = vadd.f32 %v704, %v705
    %v708 = vpack.c.bf16 %v707, %v706
    %v709 = vperm.slane %v71, 4
    %v714 = vunpack.c.l.b16 %v64
    %v715 = vunpack.c.l.b16 %v66
    %v716 = vunpack.c.l.b16 %v68
    %v717 = vunpack.c.l.b16 %v70
    %v718 = vpack.c.b16 %v715, %v714
    %v719 = vpack.c.b16 %v717, %v716
    %v723 = vsel %vm102, %v708, 0
    %725 = vmatpush.bf16.msra.mxu0 0
    %726 = vmatpush.bf16.msra.mxu0 0
    %727 = vmatpush.bf16.msra.mxu0 0
    %728 = vmatpush.bf16.msra.mxu0 0
    %729 = vmatpush.bf16.msra.mxu0 0
    %730 = vmatpush.bf16.msra.mxu0 0
    %731 = vmatpush.bf16.msra.mxu0 %v719
    %732 = vmatpush.bf16.msra.mxu0 %v718
    %733 = vmatmul.bf16.gmra.mxu0 %v723
    %v734 = vpop.f32.mrf.mxu0
    %v735 = vadd.f32 %v709, %v734
    %v736 = vpop.f32.mrf.mxu0
    %v737 = vadd.f32 %v709, %v736
    %738 = vdwg.mxu0
    %v739 = vmul.f32 %v735, 0.5
    %v740 = vmul.f32 %v737, 0.5
    %v741 = vmul.f32 %v735, 0.044715
    %v742 = vmul.f32 %v737, 0.044715
    %v743 = vmul.f32 %v741, %v735
    %v744 = vmul.f32 %v742, %v737
    %v745 = vmul.f32 %v743, %v735
    %v746 = vmul.f32 %v744, %v737
    %v747 = vadd.f32 %v735, %v745
    %v748 = vadd.f32 %v737, %v746
    %v749 = vmul.f32 %v747, 0.7978846
    %v750 = vmul.f32 %v748, 0.7978846
    %v751 = vtanh.pop %v749
    %v752 = vtanh.pop %v750
    %v753 = vadd.f32 %v751, 1.0
    %v754 = vadd.f32 %v752, 1.0
    %v755 = vmul.f32 %v739, %v753
    %v756 = vmul.f32 %v740, %v754
    %v757 = vpack.c.bf16 %v756, %v755
    %v758 = vperm.slane %v71, 5
    %v775 = vunpack.c.l.b16 %v72
    %v776 = vunpack.c.l.b16 %v73
    %v777 = vunpack.c.l.b16 %v74
    %v778 = vunpack.c.l.b16 %v75
    %v779 = vunpack.c.l.b16 %v76
    %v780 = vunpack.c.l.b16 %v77
    %v781 = vunpack.c.l.b16 %v78
    %v782 = vunpack.c.l.b16 %v79
    %v783 = vunpack.c.l.b16 %v80
    %v784 = vunpack.c.l.b16 %v81
    %v785 = vunpack.c.l.b16 %v82
    %v786 = vunpack.c.l.b16 %v83
    %v787 = vunpack.c.l.b16 %v84
    %v788 = vunpack.c.l.b16 %v85
    %v789 = vunpack.c.l.b16 %v86
    %v790 = vunpack.c.l.b16 %v87
    %v791 = vpack.c.b16 %v776, %v775
    %v792 = vpack.c.b16 %v778, %v777
    %v793 = vpack.c.b16 %v780, %v779
    %v794 = vpack.c.b16 %v782, %v781
    %v795 = vpack.c.b16 %v784, %v783
    %v796 = vpack.c.b16 %v786, %v785
    %v797 = vpack.c.b16 %v788, %v787
    %v798 = vpack.c.b16 %v790, %v789
    %807 = vmatpush.bf16.msra.mxu0 %v798
    %808 = vmatpush.bf16.msra.mxu0 %v797
    %809 = vmatpush.bf16.msra.mxu0 %v796
    %810 = vmatpush.bf16.msra.mxu0 %v795
    %811 = vmatpush.bf16.msra.mxu0 %v794
    %812 = vmatpush.bf16.msra.mxu0 %v793
    %813 = vmatpush.bf16.msra.mxu0 %v792
    %814 = vmatpush.bf16.msra.mxu0 %v791
    %815 = vmatmul.bf16.gmra.mxu0 %v757
    %v816 = vpop.f32.mrf.mxu0
    %v817 = vadd.f32 %v758, %v816
    %v818 = vpop.f32.mrf.mxu0
    %v819 = vadd.f32 %v758, %v818
    %820 = vdwg.mxu0
    %v821 = vadd.f32 %v706, %v817
    %v822 = vadd.f32 %v707, %v819
    %v823 = vsel %vm102, %v821, 0.0
    %824 = vadd.xlane.f32.xlu0 %v823
    %v825 = vpop.xlane.xlu0 %824
    %v826 = vsel %vm102, %v822, 0.0
    %827 = vadd.xlane.f32.xlu0 %v826
    %v828 = vpop.xlane.xlu0 %827
    %v829 = vmul.f32 %v825, %v663
    %v830 = vmul.f32 %v828, %v663
    %v831 = vsub.f32 %v821, %v829
    %v832 = vsub.f32 %v822, %v830
    %v833 = vmul.f32 %v831, %v831
    %v834 = vmul.f32 %v832, %v832
    %v835 = vsel %vm102, %v833, 0.0
    %836 = vadd.xlane.f32.xlu0 %v835
    %v837 = vpop.xlane.xlu0 %836
    %v838 = vsel %vm102, %v834, 0.0
    %839 = vadd.xlane.f32.xlu0 %v838
    %v840 = vpop.xlane.xlu0 %839
    %v841 = vmul.f32 %v837, %v663
    %v842 = vmul.f32 %v840, %v663
    %v843 = vadd.f32 %v841, 1e-05
    %v844 = vadd.f32 %v842, 1e-05
    %v845 = vrsqrt.pop %v843
    %v846 = vmul.f32 %v845, %v843
    %v847 = vmul.f32 %v846, %v845
    %v848 = vmul.f32 0.5, %v847
    %v849 = vsub.f32 1.5, %v848
    %v850 = vmul.f32 %v845, %v849
    %vm851 = vweird.f32 %v843
    %vm852 = vweird.f32 %v845
    %vm853 = vmor %vm851, %vm852
    %v854 = vsel %vm853, %v845, %v850
    %v855 = vrsqrt.pop %v844
    %v856 = vmul.f32 %v855, %v844
    %v857 = vmul.f32 %v856, %v855
    %v858 = vmul.f32 0.5, %v857
    %v859 = vsub.f32 1.5, %v858
    %v860 = vmul.f32 %v855, %v859
    %vm861 = vweird.f32 %v844
    %vm862 = vweird.f32 %v855
    %vm863 = vmor %vm861, %vm862
    %v864 = vsel %vm863, %v855, %v860
    %v865 = vmul.f32 %v831, %v854
    %v866 = vmul.f32 %v832, %v864
    %v867 = vperm.slane %v71, 6
    %v868 = vmul.f32 %v865, %v867
    %v869 = vmul.f32 %v866, %v867
    %v870 = vperm.slane %v71, 7
    %v871 = vadd.f32 %v868, %v870
    %v872 = vadd.f32 %v869, %v870
    %s873 = scalar_lea.vmem %s2, 48
    %v874 = vld [vmem:[%s873] sm:$0xff]
    %v875 = vld [vmem:[%s873 + $0x8] sm:$0xf]
    %v876 = vld [vmem:[%s873 + $0xc] sm:$0xff]
    %v877 = vld [vmem:[%s873 + $0x14] sm:$0xf]
    %v878 = vld [vmem:[%s873 + $0x18] sm:$0xff]
    %v879 = vld [vmem:[%s873 + $0x20] sm:$0xf]
    %v880 = vld [vmem:[%s873 + $0x24] sm:$0xff]
    %v881 = vld [vmem:[%s873 + $0x2c] sm:$0xf]
    %s882 = scalar_lea.vmem [#allocation5], 8
    %v883 = vld [vmem:[%s882] sm:$0xff]
    %s884 = scalar_lea.vmem %s3, 64
    %v885 = vld [vmem:[%s884] sm:$0xf]
    %v886 = vld [vmem:[%s884 + $0x4] sm:$0xf]
    %v887 = vld [vmem:[%s884 + $0x8] sm:$0xf]
    %v888 = vld [vmem:[%s884 + $0xc] sm:$0xf]
    %v889 = vld [vmem:[%s884 + $0x10] sm:$0xf]
    %v890 = vld [vmem:[%s884 + $0x14] sm:$0xf]
    %v891 = vld [vmem:[%s884 + $0x18] sm:$0xf]
    %v892 = vld [vmem:[%s884 + $0x1c] sm:$0xf]
    %v893 = vld [vmem:[%s884 + $0x20] sm:$0xf]
    %v894 = vld [vmem:[%s884 + $0x24] sm:$0xf]
    %v895 = vld [vmem:[%s884 + $0x28] sm:$0xf]
    %v896 = vld [vmem:[%s884 + $0x2c] sm:$0xf]
    %v897 = vld [vmem:[%s884 + $0x30] sm:$0xf]
    %v898 = vld [vmem:[%s884 + $0x34] sm:$0xf]
    %v899 = vld [vmem:[%s884 + $0x38] sm:$0xf]
    %v900 = vld [vmem:[%s884 + $0x3c] sm:$0xf]
    %v901 = vpack.c.bf16 %v872, %v871
    %v902 = vperm.slane %v883, 0
    %v907 = vunpack.c.l.b16 %v874
    %v908 = vunpack.c.l.b16 %v876
    %v909 = vunpack.c.l.b16 %v878
    %v910 = vunpack.c.l.b16 %v880
    %v911 = vpack.c.b16 %v908, %v907
    %v912 = vpack.c.b16 %v910, %v909
    %v916 = vsel %vm102, %v901, 0
    %918 = vmatpush.bf16.msra.mxu0 0
    %919 = vmatpush.bf16.msra.mxu0 0
    %920 = vmatpush.bf16.msra.mxu0 0
    %921 = vmatpush.bf16.msra.mxu0 0
    %922 = vmatpush.bf16.msra.mxu0 0
    %923 = vmatpush.bf16.msra.mxu0 0
    %924 = vmatpush.bf16.msra.mxu0 %v912
    %925 = vmatpush.bf16.msra.mxu0 %v911
    %926 = vmatmul.bf16.gmra.mxu0 %v916
    %v927 = vpop.f32.mrf.mxu0
    %v928 = vadd.f32 %v902, %v927
    %v929 = vpop.f32.mrf.mxu0
    %v930 = vadd.f32 %v902, %v929
    %931 = vdwg.mxu0
    %v932 = vpack.c.bf16 %v928, %v928
    %v933 = vpack.c.bf16 %v930, %v930
    %v935 = vunpack.c.l.b16 %v932
    %v936 = vpack.c.b16 %v935, %v935
    %937 = vrot.lane.b32.xlu0 %v936, 96
    %v938 = vpop.permute.xlu0 %937
    %v940 = vsel %vm127, %v932, 0
    %v943 = vsel %vm127, %v938, 0
    %945 = vmatpush.bf16.xpose.msra.mxu0 0
    %946 = vmatpush.bf16.xpose.msra.mxu0 0
    %947 = vmatpush.bf16.xpose.msra.mxu0 0
    %948 = vmatpush.bf16.xpose.msra.mxu0 0
    %949 = vmatpush.bf16.xpose.msra.mxu0 0
    %950 = vmatpush.bf16.xpose.msra.mxu0 0
    %951 = vmatpush.bf16.xpose.msra.mxu0 0
    %952 = vmatpush.bf16.xpose.msra.mxu0 %v943
    %953 = vmatmul.bf16.gmra.mxu0 %v940
    %v954 = vpop.f32.mrf.mxu0
    %v955 = vadd.f32 0.0, %v954
    %v956 = vpop.f32.mrf.mxu0
    %957 = vdwg.mxu0
    %v959 = vunpack.c.l.b16 %v933
    %v960 = vpack.c.b16 %v959, %v959
    %961 = vrot.lane.b32.xlu0 %v960, 96
    %v962 = vpop.permute.xlu0 %961
    %v964 = vsel %vm127, %v933, 0
    %v967 = vsel %vm127, %v962, 0
    %969 = vmatpush.bf16.xpose.msra.mxu0 0
    %970 = vmatpush.bf16.xpose.msra.mxu0 0
    %971 = vmatpush.bf16.xpose.msra.mxu0 0
    %972 = vmatpush.bf16.xpose.msra.mxu0 0
    %973 = vmatpush.bf16.xpose.msra.mxu0 0
    %974 = vmatpush.bf16.xpose.msra.mxu0 0
    %975 = vmatpush.bf16.xpose.msra.mxu0 0
    %976 = vmatpush.bf16.xpose.msra.mxu0 %v967
    %977 = vmatmul.bf16.gmra.mxu0 %v964
    %v978 = vpop.f32.mrf.mxu0
    %v979 = vadd.f32 0.0, %v978
    %v980 = vpop.f32.mrf.mxu0
    %981 = vdwg.mxu0
    %v982 = vmul.f32 %v955, 0.35355338
    %v983 = vmul.f32 %v979, 0.35355338
    %v984 = vadd.f32 %v982, %v57
    %v985 = vadd.f32 %v983, %v58
    %v986 = vsel %vm127, %v984, -inf
    %987 = vmax.xlane.f32.xlu0 %v986
    %v988 = vpop.xlane.xlu0 %987
    %v989 = vsel %vm127, %v985, -inf
    %990 = vmax.xlane.f32.xlu0 %v989
    %v991 = vpop.xlane.xlu0 %990
    %v992 = vsub.f32 %v984, %v988
    %v993 = vsub.f32 %v985, %v991
    %v994 = vmul.f32 %v992, 1.442695
    %v995 = vpow.pop %v994
    %v996 = vmul.f32 %v993, 1.442695
    %v997 = vpow.pop %v996
    %v998 = vsel %vm127, %v995, 0.0
    %999 = vadd.xlane.f32.xlu0 %v998
    %v1000 = vpop.xlane.xlu0 %999
    %v1001 = vsel %vm127, %v997, 0.0
    %1002 = vadd.xlane.f32.xlu0 %v1001
    %v1003 = vpop.xlane.xlu0 %1002
    %v1004 = vrcp.pop %v1000
    %v1005 = vrcp.pop %v1003
    %v1006 = vmul.f32 %v995, %v1004
    %v1007 = vmul.f32 %v997, %v1005
    %v1008 = vpack.c.bf16 %v1006, %v1006
    %v1009 = vpack.c.bf16 %v1007, %v1007
    %1010 = vrot.lane.b32.xlu0 %v936, 64
    %v1011 = vpop.permute.xlu0 %1010
    %v1013 = vsel %vm127, %v1008, 0
    %v1016 = vsel %vm204, %v1011, 0
    %1018 = vmatpush.bf16.msra.mxu0 0
    %1019 = vmatpush.bf16.msra.mxu0 0
    %1020 = vmatpush.bf16.msra.mxu0 0
    %1021 = vmatpush.bf16.msra.mxu0 0
    %1022 = vmatpush.bf16.msra.mxu0 0
    %1023 = vmatpush.bf16.msra.mxu0 0
    %1024 = vmatpush.bf16.msra.mxu0 0
    %1025 = vmatpush.bf16.msra.mxu0 %v1016
    %1026 = vmatmul.bf16.gmra.mxu0 %v1013
    %v1027 = vpop.f32.mrf.mxu0
    %v1028 = vadd.f32 0.0, %v1027
    %v1029 = vpop.f32.mrf.mxu0
    %1030 = vdwg.mxu0
    %1031 = vrot.lane.b32.xlu0 %v960, 64
    %v1032 = vpop.permute.xlu0 %1031
    %v1034 = vsel %vm127, %v1009, 0
    %v1037 = vsel %vm204, %v1032, 0
    %1039 = vmatpush.bf16.msra.mxu0 0
    %1040 = vmatpush.bf16.msra.mxu0 0
    %1041 = vmatpush.bf16.msra.mxu0 0
    %1042 = vmatpush.bf16.msra.mxu0 0
    %1043 = vmatpush.bf16.msra.mxu0 0
    %1044 = vmatpush.bf16.msra.mxu0 0
    %1045 = vmatpush.bf16.msra.mxu0 0
    %1046 = vmatpush.bf16.msra.mxu0 %v1037
    %1047 = vmatmul.bf16.gmra.mxu0 %v1034
    %v1048 = vpop.f32.mrf.mxu0
    %v1049 = vadd.f32 0.0, %v1048
    %v1050 = vpop.f32.mrf.mxu0
    %1051 = vdwg.mxu0
    %1052 = vrot.lane.b32.xlu0 %v936, 120
    %v1053 = vpop.permute.xlu0 %1052
    %1054 = vrot.lane.b32.xlu0 %v936, 88
    %v1055 = vpop.permute.xlu0 %1054
    %v1057 = vsel %vm127, %v1053, 0
    %v1060 = vsel %vm127, %v1055, 0
    %1062 = vmatpush.bf16.xpose.msra.mxu0 0
    %1063 = vmatpush.bf16.xpose.msra.mxu0 0
    %1064 = vmatpush.bf16.xpose.msra.mxu0 0
    %1065 = vmatpush.bf16.xpose.msra.mxu0 0
    %1066 = vmatpush.bf16.xpose.msra.mxu0 0
    %1067 = vmatpush.bf16.xpose.msra.mxu0 0
    %1068 = vmatpush.bf16.xpose.msra.mxu0 0
    %1069 = vmatpush.bf16.xpose.msra.mxu0 %v1060
    %1070 = vmatmul.bf16.gmra.mxu0 %v1057
    %v1071 = vpop.f32.mrf.mxu0
    %v1072 = vadd.f32 0.0, %v1071
    %v1073 = vpop.f32.mrf.mxu0
    %1074 = vdwg.mxu0
    %1075 = vrot.lane.b32.xlu0 %v960, 120
    %v1076 = vpop.permute.xlu0 %1075
    %1077 = vrot.lane.b32.xlu0 %v960, 88
    %v1078 = vpop.permute.xlu0 %1077
    %v1080 = vsel %vm127, %v1076, 0
    %v1083 = vsel %vm127, %v1078, 0
    %1085 = vmatpush.bf16.xpose.msra.mxu0 0
    %1086 = vmatpush.bf16.xpose.msra.mxu0 0
    %1087 = vmatpush.bf16.xpose.msra.mxu0 0
    %1088 = vmatpush.bf16.xpose.msra.mxu0 0
    %1089 = vmatpush.bf16.xpose.msra.mxu0 0
    %1090 = vmatpush.bf16.xpose.msra.mxu0 0
    %1091 = vmatpush.bf16.xpose.msra.mxu0 0
    %1092 = vmatpush.bf16.xpose.msra.mxu0 %v1083
    %1093 = vmatmul.bf16.gmra.mxu0 %v1080
    %v1094 = vpop.f32.mrf.mxu0
    %v1095 = vadd.f32 0.0, %v1094
    %v1096 = vpop.f32.mrf.mxu0
    %1097 = vdwg.mxu0
    %v1098 = vmul.f32 %v1072, 0.35355338
    %v1099 = vmul.f32 %v1095, 0.35355338
    %v1100 = vadd.f32 %v1098, %v57
    %v1101 = vadd.f32 %v1099, %v58
    %v1102 = vsel %vm127, %v1100, -inf
    %1103 = vmax.xlane.f32.xlu0 %v1102
    %v1104 = vpop.xlane.xlu0 %1103
    %v1105 = vsel %vm127, %v1101, -inf
    %1106 = vmax.xlane.f32.xlu0 %v1105
    %v1107 = vpop.xlane.xlu0 %1106
    %v1108 = vsub.f32 %v1100, %v1104
    %v1109 = vsub.f32 %v1101, %v1107
    %v1110 = vmul.f32 %v1108, 1.442695
    %v1111 = vpow.pop %v1110
    %v1112 = vmul.f32 %v1109, 1.442695
    %v1113 = vpow.pop %v1112
    %v1114 = vsel %vm127, %v1111, 0.0
    %1115 = vadd.xlane.f32.xlu0 %v1114
    %v1116 = vpop.xlane.xlu0 %1115
    %v1117 = vsel %vm127, %v1113, 0.0
    %1118 = vadd.xlane.f32.xlu0 %v1117
    %v1119 = vpop.xlane.xlu0 %1118
    %v1120 = vrcp.pop %v1116
    %v1121 = vrcp.pop %v1119
    %v1122 = vmul.f32 %v1111, %v1120
    %v1123 = vmul.f32 %v1113, %v1121
    %v1124 = vpack.c.bf16 %v1122, %v1122
    %v1125 = vpack.c.bf16 %v1123, %v1123
    %1126 = vrot.lane.b32.xlu0 %v936, 56
    %v1127 = vpop.permute.xlu0 %1126
    %v1129 = vsel %vm127, %v1124, 0
    %v1132 = vsel %vm204, %v1127, 0
    %1134 = vmatpush.bf16.msra.mxu0 0
    %1135 = vmatpush.bf16.msra.mxu0 0
    %1136 = vmatpush.bf16.msra.mxu0 0
    %1137 = vmatpush.bf16.msra.mxu0 0
    %1138 = vmatpush.bf16.msra.mxu0 0
    %1139 = vmatpush.bf16.msra.mxu0 0
    %1140 = vmatpush.bf16.msra.mxu0 0
    %1141 = vmatpush.bf16.msra.mxu0 %v1132
    %1142 = vmatmul.bf16.gmra.mxu0 %v1129
    %v1143 = vpop.f32.mrf.mxu0
    %v1144 = vadd.f32 0.0, %v1143
    %v1145 = vpop.f32.mrf.mxu0
    %1146 = vdwg.mxu0
    %1147 = vrot.lane.b32.xlu0 %v960, 56
    %v1148 = vpop.permute.xlu0 %1147
    %v1150 = vsel %vm127, %v1125, 0
    %v1153 = vsel %vm204, %v1148, 0
    %1155 = vmatpush.bf16.msra.mxu0 0
    %1156 = vmatpush.bf16.msra.mxu0 0
    %1157 = vmatpush.bf16.msra.mxu0 0
    %1158 = vmatpush.bf16.msra.mxu0 0
    %1159 = vmatpush.bf16.msra.mxu0 0
    %1160 = vmatpush.bf16.msra.mxu0 0
    %1161 = vmatpush.bf16.msra.mxu0 0
    %1162 = vmatpush.bf16.msra.mxu0 %v1153
    %1163 = vmatmul.bf16.gmra.mxu0 %v1150
    %v1164 = vpop.f32.mrf.mxu0
    %v1165 = vadd.f32 0.0, %v1164
    %v1166 = vpop.f32.mrf.mxu0
    %1167 = vdwg.mxu0
    %1168 = vrot.lane.b32.xlu0 %v936, 112
    %v1169 = vpop.permute.xlu0 %1168
    %1170 = vrot.lane.b32.xlu0 %v936, 80
    %v1171 = vpop.permute.xlu0 %1170
    %v1173 = vsel %vm127, %v1169, 0
    %v1176 = vsel %vm127, %v1171, 0
    %1178 = vmatpush.bf16.xpose.msra.mxu0 0
    %1179 = vmatpush.bf16.xpose.msra.mxu0 0
    %1180 = vmatpush.bf16.xpose.msra.mxu0 0
    %1181 = vmatpush.bf16.xpose.msra.mxu0 0
    %1182 = vmatpush.bf16.xpose.msra.mxu0 0
    %1183 = vmatpush.bf16.xpose.msra.mxu0 0
    %1184 = vmatpush.bf16.xpose.msra.mxu0 0
    %1185 = vmatpush.bf16.xpose.msra.mxu0 %v1176
    %1186 = vmatmul.bf16.gmra.mxu0 %v1173
    %v1187 = vpop.f32.mrf.mxu0
    %v1188 = vadd.f32 0.0, %v1187
    %v1189 = vpop.f32.mrf.mxu0
    %1190 = vdwg.mxu0
    %1191 = vrot.lane.b32.xlu0 %v960, 112
    %v1192 = vpop.permute.xlu0 %1191
    %1193 = vrot.lane.b32.xlu0 %v960, 80
    %v1194 = vpop.permute.xlu0 %1193
    %v1196 = vsel %vm127, %v1192, 0
    %v1199 = vsel %vm127, %v1194, 0
    %1201 = vmatpush.bf16.xpose.msra.mxu0 0
    %1202 = vmatpush.bf16.xpose.msra.mxu0 0
    %1203 = vmatpush.bf16.xpose.msra.mxu0 0
    %1204 = vmatpush.bf16.xpose.msra.mxu0 0
    %1205 = vmatpush.bf16.xpose.msra.mxu0 0
    %1206 = vmatpush.bf16.xpose.msra.mxu0 0
    %1207 = vmatpush.bf16.xpose.msra.mxu0 0
    %1208 = vmatpush.bf16.xpose.msra.mxu0 %v1199
    %1209 = vmatmul.bf16.gmra.mxu0 %v1196
    %v1210 = vpop.f32.mrf.mxu0
    %v1211 = vadd.f32 0.0, %v1210
    %v1212 = vpop.f32.mrf.mxu0
    %1213 = vdwg.mxu0
    %v1214 = vmul.f32 %v1188, 0.35355338
    %v1215 = vmul.f32 %v1211, 0.35355338
    %v1216 = vadd.f32 %v1214, %v57
    %v1217 = vadd.f32 %v1215, %v58
    %v1218 = vsel %vm127, %v1216, -inf
    %1219 = vmax.xlane.f32.xlu0 %v1218
    %v1220 = vpop.xlane.xlu0 %1219
    %v1221 = vsel %vm127, %v1217, -inf
    %1222 = vmax.xlane.f32.xlu0 %v1221
    %v1223 = vpop.xlane.xlu0 %1222
    %v1224 = vsub.f32 %v1216, %v1220
    %v1225 = vsub.f32 %v1217, %v1223
    %v1226 = vmul.f32 %v1224, 1.442695
    %v1227 = vpow.pop %v1226
    %v1228 = vmul.f32 %v1225, 1.442695
    %v1229 = vpow.pop %v1228
    %v1230 = vsel %vm127, %v1227, 0.0
    %1231 = vadd.xlane.f32.xlu0 %v1230
    %v1232 = vpop.xlane.xlu0 %1231
    %v1233 = vsel %vm127, %v1229, 0.0
    %1234 = vadd.xlane.f32.xlu0 %v1233
    %v1235 = vpop.xlane.xlu0 %1234
    %v1236 = vrcp.pop %v1232
    %v1237 = vrcp.pop %v1235
    %v1238 = vmul.f32 %v1227, %v1236
    %v1239 = vmul.f32 %v1229, %v1237
    %v1240 = vpack.c.bf16 %v1238, %v1238
    %v1241 = vpack.c.bf16 %v1239, %v1239
    %1242 = vrot.lane.b32.xlu0 %v936, 48
    %v1243 = vpop.permute.xlu0 %1242
    %v1245 = vsel %vm127, %v1240, 0
    %v1248 = vsel %vm204, %v1243, 0
    %1250 = vmatpush.bf16.msra.mxu0 0
    %1251 = vmatpush.bf16.msra.mxu0 0
    %1252 = vmatpush.bf16.msra.mxu0 0
    %1253 = vmatpush.bf16.msra.mxu0 0
    %1254 = vmatpush.bf16.msra.mxu0 0
    %1255 = vmatpush.bf16.msra.mxu0 0
    %1256 = vmatpush.bf16.msra.mxu0 0
    %1257 = vmatpush.bf16.msra.mxu0 %v1248
    %1258 = vmatmul.bf16.gmra.mxu0 %v1245
    %v1259 = vpop.f32.mrf.mxu0
    %v1260 = vadd.f32 0.0, %v1259
    %v1261 = vpop.f32.mrf.mxu0
    %1262 = vdwg.mxu0
    %1263 = vrot.lane.b32.xlu0 %v960, 48
    %v1264 = vpop.permute.xlu0 %1263
    %v1266 = vsel %vm127, %v1241, 0
    %v1269 = vsel %vm204, %v1264, 0
    %1271 = vmatpush.bf16.msra.mxu0 0
    %1272 = vmatpush.bf16.msra.mxu0 0
    %1273 = vmatpush.bf16.msra.mxu0 0
    %1274 = vmatpush.bf16.msra.mxu0 0
    %1275 = vmatpush.bf16.msra.mxu0 0
    %1276 = vmatpush.bf16.msra.mxu0 0
    %1277 = vmatpush.bf16.msra.mxu0 0
    %1278 = vmatpush.bf16.msra.mxu0 %v1269
    %1279 = vmatmul.bf16.gmra.mxu0 %v1266
    %v1280 = vpop.f32.mrf.mxu0
    %v1281 = vadd.f32 0.0, %v1280
    %v1282 = vpop.f32.mrf.mxu0
    %1283 = vdwg.mxu0
    %1284 = vrot.lane.b32.xlu0 %v936, 104
    %v1285 = vpop.permute.xlu0 %1284
    %1286 = vrot.lane.b32.xlu0 %v936, 72
    %v1287 = vpop.permute.xlu0 %1286
    %v1289 = vsel %vm127, %v1285, 0
    %v1292 = vsel %vm127, %v1287, 0
    %1294 = vmatpush.bf16.xpose.msra.mxu0 0
    %1295 = vmatpush.bf16.xpose.msra.mxu0 0
    %1296 = vmatpush.bf16.xpose.msra.mxu0 0
    %1297 = vmatpush.bf16.xpose.msra.mxu0 0
    %1298 = vmatpush.bf16.xpose.msra.mxu0 0
    %1299 = vmatpush.bf16.xpose.msra.mxu0 0
    %1300 = vmatpush.bf16.xpose.msra.mxu0 0
    %1301 = vmatpush.bf16.xpose.msra.mxu0 %v1292
    %1302 = vmatmul.bf16.gmra.mxu0 %v1289
    %v1303 = vpop.f32.mrf.mxu0
    %v1304 = vadd.f32 0.0, %v1303
    %v1305 = vpop.f32.mrf.mxu0
    %1306 = vdwg.mxu0
    %1307 = vrot.lane.b32.xlu0 %v960, 104
    %v1308 = vpop.permute.xlu0 %1307
    %1309 = vrot.lane.b32.xlu0 %v960, 72
    %v1310 = vpop.permute.xlu0 %1309
    %v1312 = vsel %vm127, %v1308, 0
    %v1315 = vsel %vm127, %v1310, 0
    %1317 = vmatpush.bf16.xpose.msra.mxu0 0
    %1318 = vmatpush.bf16.xpose.msra.mxu0 0
    %1319 = vmatpush.bf16.xpose.msra.mxu0 0
    %1320 = vmatpush.bf16.xpose.msra.mxu0 0
    %1321 = vmatpush.bf16.xpose.msra.mxu0 0
    %1322 = vmatpush.bf16.xpose.msra.mxu0 0
    %1323 = vmatpush.bf16.xpose.msra.mxu0 0
    %1324 = vmatpush.bf16.xpose.msra.mxu0 %v1315
    %1325 = vmatmul.bf16.gmra.mxu0 %v1312
    %v1326 = vpop.f32.mrf.mxu0
    %v1327 = vadd.f32 0.0, %v1326
    %v1328 = vpop.f32.mrf.mxu0
    %1329 = vdwg.mxu0
    %v1330 = vmul.f32 %v1304, 0.35355338
    %v1331 = vmul.f32 %v1327, 0.35355338
    %v1332 = vadd.f32 %v1330, %v57
    %v1333 = vadd.f32 %v1331, %v58
    %v1334 = vsel %vm127, %v1332, -inf
    %1335 = vmax.xlane.f32.xlu0 %v1334
    %v1336 = vpop.xlane.xlu0 %1335
    %v1337 = vsel %vm127, %v1333, -inf
    %1338 = vmax.xlane.f32.xlu0 %v1337
    %v1339 = vpop.xlane.xlu0 %1338
    %v1340 = vsub.f32 %v1332, %v1336
    %v1341 = vsub.f32 %v1333, %v1339
    %v1342 = vmul.f32 %v1340, 1.442695
    %v1343 = vpow.pop %v1342
    %v1344 = vmul.f32 %v1341, 1.442695
    %v1345 = vpow.pop %v1344
    %v1346 = vsel %vm127, %v1343, 0.0
    %1347 = vadd.xlane.f32.xlu0 %v1346
    %v1348 = vpop.xlane.xlu0 %1347
    %v1349 = vsel %vm127, %v1345, 0.0
    %1350 = vadd.xlane.f32.xlu0 %v1349
    %v1351 = vpop.xlane.xlu0 %1350
    %v1352 = vrcp.pop %v1348
    %v1353 = vrcp.pop %v1351
    %v1354 = vmul.f32 %v1343, %v1352
    %v1355 = vmul.f32 %v1345, %v1353
    %v1356 = vpack.c.bf16 %v1354, %v1354
    %v1357 = vpack.c.bf16 %v1355, %v1355
    %1358 = vrot.lane.b32.xlu0 %v936, 40
    %v1359 = vpop.permute.xlu0 %1358
    %v1361 = vsel %vm127, %v1356, 0
    %v1364 = vsel %vm204, %v1359, 0
    %1366 = vmatpush.bf16.msra.mxu0 0
    %1367 = vmatpush.bf16.msra.mxu0 0
    %1368 = vmatpush.bf16.msra.mxu0 0
    %1369 = vmatpush.bf16.msra.mxu0 0
    %1370 = vmatpush.bf16.msra.mxu0 0
    %1371 = vmatpush.bf16.msra.mxu0 0
    %1372 = vmatpush.bf16.msra.mxu0 0
    %1373 = vmatpush.bf16.msra.mxu0 %v1364
    %1374 = vmatmul.bf16.gmra.mxu0 %v1361
    %v1375 = vpop.f32.mrf.mxu0
    %v1376 = vadd.f32 0.0, %v1375
    %v1377 = vpop.f32.mrf.mxu0
    %1378 = vdwg.mxu0
    %1379 = vrot.lane.b32.xlu0 %v960, 40
    %v1380 = vpop.permute.xlu0 %1379
    %v1382 = vsel %vm127, %v1357, 0
    %v1385 = vsel %vm204, %v1380, 0
    %1387 = vmatpush.bf16.msra.mxu0 0
    %1388 = vmatpush.bf16.msra.mxu0 0
    %1389 = vmatpush.bf16.msra.mxu0 0
    %1390 = vmatpush.bf16.msra.mxu0 0
    %1391 = vmatpush.bf16.msra.mxu0 0
    %1392 = vmatpush.bf16.msra.mxu0 0
    %1393 = vmatpush.bf16.msra.mxu0 0
    %1394 = vmatpush.bf16.msra.mxu0 %v1385
    %1395 = vmatmul.bf16.gmra.mxu0 %v1382
    %v1396 = vpop.f32.mrf.mxu0
    %v1397 = vadd.f32 0.0, %v1396
    %v1398 = vpop.f32.mrf.mxu0
    %1399 = vdwg.mxu0
    %1402 = vrot.lane.b32.xlu0 %v1144, 8
    %v1403 = vpop.permute.xlu0 %1402
    %1404 = vrot.lane.b32.xlu0 %v1165, 8
    %v1405 = vpop.permute.xlu0 %1404
    %1410 = vrot.lane.b32.xlu0 %v1260, 16
    %v1411 = vpop.permute.xlu0 %1410
    %1412 = vrot.lane.b32.xlu0 %v1281, 16
    %v1413 = vpop.permute.xlu0 %1412
    %1418 = vrot.lane.b32.xlu0 %v1376, 24
    %v1419 = vpop.permute.xlu0 %1418
    %1420 = vrot.lane.b32.xlu0 %v1397, 24
    %v1421 = vpop.permute.xlu0 %1420
    %v1424 = vsel %vm127, %v1028, %v1403
    %v1425 = vsel %vm127, %v1049, %v1405
    %v1426 = vsel %vm616, %v1424, %v1411
    %v1427 = vsel %vm616, %v1425, %v1413
    %v1428 = vsel %vm619, %v1426, %v1419
    %v1429 = vsel %vm619, %v1427, %v1421
    %v1430 = vpack.c.bf16 %v1429, %v1428
    %v1431 = vperm.slane %v883, 1
    %v1432 = vunpack.c.h.b16 %v874
    %v1433 = vunpack.c.h.b16 %v876
    %v1434 = vunpack.c.h.b16 %v878
    %v1435 = vunpack.c.h.b16 %v880
    %v1436 = vpack.c.b16 %v1433, %v1432
    %v1437 = vpack.c.b16 %v1435, %v1434
    %v1441 = vsel %vm102, %v1430, 0
    %1443 = vmatpush.bf16.msra.mxu0 0
    %1444 = vmatpush.bf16.msra.mxu0 0
    %1445 = vmatpush.bf16.msra.mxu0 0
    %1446 = vmatpush.bf16.msra.mxu0 0
    %1447 = vmatpush.bf16.msra.mxu0 0
    %1448 = vmatpush.bf16.msra.mxu0 0
    %1449 = vmatpush.bf16.msra.mxu0 %v1437
    %1450 = vmatpush.bf16.msra.mxu0 %v1436
    %1451 = vmatmul.bf16.gmra.mxu0 %v1441
    %v1452 = vpop.f32.mrf.mxu0
    %v1453 = vadd.f32 %v1431, %v1452
    %v1454 = vpop.f32.mrf.mxu0
    %v1455 = vadd.f32 %v1431, %v1454
    %1456 = vdwg.mxu0
    %v1457 = vadd.f32 %v871, %v1453
    %v1458 = vadd.f32 %v872, %v1455
    %v1459 = vsel %vm102, %v1457, 0.0
    %1460 = vadd.xlane.f32.xlu0 %v1459
    %v1461 = vpop.xlane.xlu0 %1460
    %v1462 = vsel %vm102, %v1458, 0.0
    %1463 = vadd.xlane.f32.xlu0 %v1462
    %v1464 = vpop.xlane.xlu0 %1463
    %v1465 = vmul.f32 %v1461, %v663
    %v1466 = vmul.f32 %v1464, %v663
    %v1467 = vsub.f32 %v1457, %v1465
    %v1468 = vsub.f32 %v1458, %v1466
    %v1469 = vmul.f32 %v1467, %v1467
    %v1470 = vmul.f32 %v1468, %v1468
    %v1471 = vsel %vm102, %v1469, 0.0
    %1472 = vadd.xlane.f32.xlu0 %v1471
    %v1473 = vpop.xlane.xlu0 %1472
    %v1474 = vsel %vm102, %v1470, 0.0
    %1475 = vadd.xlane.f32.xlu0 %v1474
    %v1476 = vpop.xlane.xlu0 %1475
    %v1477 = vmul.f32 %v1473, %v663
    %v1478 = vmul.f32 %v1476, %v663
    %v1479 = vadd.f32 %v1477, 1e-05
    %v1480 = vadd.f32 %v1478, 1e-05
    %v1481 = vrsqrt.pop %v1479
    %v1482 = vmul.f32 %v1481, %v1479
    %v1483 = vmul.f32 %v1482, %v1481
    %v1484 = vmul.f32 0.5, %v1483
    %v1485 = vsub.f32 1.5, %v1484
    %v1486 = vmul.f32 %v1481, %v1485
    %vm1487 = vweird.f32 %v1479
    %vm1488 = vweird.f32 %v1481
    %vm1489 = vmor %vm1487, %vm1488
    %v1490 = vsel %vm1489, %v1481, %v1486
    %v1491 = vrsqrt.pop %v1480
    %v1492 = vmul.f32 %v1491, %v1480
    %v1493 = vmul.f32 %v1492, %v1491
    %v1494 = vmul.f32 0.5, %v1493
    %v1495 = vsub.f32 1.5, %v1494
    %v1496 = vmul.f32 %v1491, %v1495
    %vm1497 = vweird.f32 %v1480
    %vm1498 = vweird.f32 %v1491
    %vm1499 = vmor %vm1497, %vm1498
    %v1500 = vsel %vm1499, %v1491, %v1496
    %v1501 = vmul.f32 %v1467, %v1490
    %v1502 = vmul.f32 %v1468, %v1500
    %v1503 = vperm.slane %v883, 2
    %v1504 = vmul.f32 %v1501, %v1503
    %v1505 = vmul.f32 %v1502, %v1503
    %v1506 = vperm.slane %v883, 3
    %v1507 = vadd.f32 %v1504, %v1506
    %v1508 = vadd.f32 %v1505, %v1506
    %v1509 = vpack.c.bf16 %v1508, %v1507
    %v1510 = vperm.slane %v883, 4
    %v1515 = vunpack.c.l.b16 %v875
    %v1516 = vunpack.c.l.b16 %v877
    %v1517 = vunpack.c.l.b16 %v879
    %v1518 = vunpack.c.l.b16 %v881
    %v1519 = vpack.c.b16 %v1516, %v1515
    %v1520 = vpack.c.b16 %v1518, %v1517
    %v1524 = vsel %vm102, %v1509, 0
    %1526 = vmatpush.bf16.msra.mxu0 0
    %1527 = vmatpush.bf16.msra.mxu0 0
    %1528 = vmatpush.bf16.msra.mxu0 0
    %1529 = vmatpush.bf16.msra.mxu0 0
    %1530 = vmatpush.bf16.msra.mxu0 0
    %1531 = vmatpush.bf16.msra.mxu0 0
    %1532 = vmatpush.bf16.msra.mxu0 %v1520
    %1533 = vmatpush.bf16.msra.mxu0 %v1519
    %1534 = vmatmul.bf16.gmra.mxu0 %v1524
    %v1535 = vpop.f32.mrf.mxu0
    %v1536 = vadd.f32 %v1510, %v1535
    %v1537 = vpop.f32.mrf.mxu0
    %v1538 = vadd.f32 %v1510, %v1537
    %1539 = vdwg.mxu0
    %v1540 = vmul.f32 %v1536, 0.5
    %v1541 = vmul.f32 %v1538, 0.5
    %v1542 = vmul.f32 %v1536, 0.044715
    %v1543 = vmul.f32 %v1538, 0.044715
    %v1544 = vmul.f32 %v1542, %v1536
    %v1545 = vmul.f32 %v1543, %v1538
    %v1546 = vmul.f32 %v1544, %v1536
    %v1547 = vmul.f32 %v1545, %v1538
    %v1548 = vadd.f32 %v1536, %v1546
    %v1549 = vadd.f32 %v1538, %v1547
    %v1550 = vmul.f32 %v1548, 0.7978846
    %v1551 = vmul.f32 %v1549, 0.7978846
    %v1552 = vtanh.pop %v1550
    %v1553 = vtanh.pop %v1551
    %v1554 = vadd.f32 %v1552, 1.0
    %v1555 = vadd.f32 %v1553, 1.0
    %v1556 = vmul.f32 %v1540, %v1554
    %v1557 = vmul.f32 %v1541, %v1555
    %v1558 = vpack.c.bf16 %v1557, %v1556
    %v1559 = vperm.slane %v883, 5
    %v1576 = vunpack.c.l.b16 %v885
    %v1577 = vunpack.c.l.b16 %v886
    %v1578 = vunpack.c.l.b16 %v887
    %v1579 = vunpack.c.l.b16 %v888
    %v1580 = vunpack.c.l.b16 %v889
    %v1581 = vunpack.c.l.b16 %v890
    %v1582 = vunpack.c.l.b16 %v891
    %v1583 = vunpack.c.l.b16 %v892
    %v1584 = vunpack.c.l.b16 %v893
    %v1585 = vunpack.c.l.b16 %v894
    %v1586 = vunpack.c.l.b16 %v895
    %v1587 = vunpack.c.l.b16 %v896
    %v1588 = vunpack.c.l.b16 %v897
    %v1589 = vunpack.c.l.b16 %v898
    %v1590 = vunpack.c.l.b16 %v899
    %v1591 = vunpack.c.l.b16 %v900
    %v1592 = vpack.c.b16 %v1577, %v1576
    %v1593 = vpack.c.b16 %v1579, %v1578
    %v1594 = vpack.c.b16 %v1581, %v1580
    %v1595 = vpack.c.b16 %v1583, %v1582
    %v1596 = vpack.c.b16 %v1585, %v1584
    %v1597 = vpack.c.b16 %v1587, %v1586
    %v1598 = vpack.c.b16 %v1589, %v1588
    %v1599 = vpack.c.b16 %v1591, %v1590
    %1608 = vmatpush.bf16.msra.mxu0 %v1599
    %1609 = vmatpush.bf16.msra.mxu0 %v1598
    %1610 = vmatpush.bf16.msra.mxu0 %v1597
    %1611 = vmatpush.bf16.msra.mxu0 %v1596
    %1612 = vmatpush.bf16.msra.mxu0 %v1595
    %1613 = vmatpush.bf16.msra.mxu0 %v1594
    %1614 = vmatpush.bf16.msra.mxu0 %v1593
    %1615 = vmatpush.bf16.msra.mxu0 %v1592
    %1616 = vmatmul.bf16.gmra.mxu0 %v1558
    %v1617 = vpop.f32.mrf.mxu0
    %v1618 = vadd.f32 %v1559, %v1617
    %v1619 = vpop.f32.mrf.mxu0
    %v1620 = vadd.f32 %v1559, %v1619
    %1621 = vdwg.mxu0
    %v1622 = vadd.f32 %v1507, %v1618
    %v1623 = vadd.f32 %v1508, %v1620
    %v1624 = vsel %vm102, %v1622, 0.0
    %1625 = vadd.xlane.f32.xlu0 %v1624
    %v1626 = vpop.xlane.xlu0 %1625
    %v1627 = vsel %vm102, %v1623, 0.0
    %1628 = vadd.xlane.f32.xlu0 %v1627
    %v1629 = vpop.xlane.xlu0 %1628
    %v1630 = vmul.f32 %v1626, %v663
    %v1631 = vmul.f32 %v1629, %v663
    %v1632 = vsub.f32 %v1622, %v1630
    %v1633 = vsub.f32 %v1623, %v1631
    %v1634 = vmul.f32 %v1632, %v1632
    %v1635 = vmul.f32 %v1633, %v1633
    %v1636 = vsel %vm102, %v1634, 0.0
    %1637 = vadd.xlane.f32.xlu0 %v1636
    %v1638 = vpop.xlane.xlu0 %1637
    %v1639 = vsel %vm102, %v1635, 0.0
    %1640 = vadd.xlane.f32.xlu0 %v1639
    %v1641 = vpop.xlane.xlu0 %1640
    %v1642 = vmul.f32 %v1638, %v663
    %v1643 = vmul.f32 %v1641, %v663
    %v1644 = vadd.f32 %v1642, 1e-05
    %v1645 = vadd.f32 %v1643, 1e-05
    %v1646 = vrsqrt.pop %v1644
    %v1647 = vmul.f32 %v1646, %v1644
    %v1648 = vmul.f32 %v1647, %v1646
    %v1649 = vmul.f32 0.5, %v1648
    %v1650 = vsub.f32 1.5, %v1649
    %v1651 = vmul.f32 %v1646, %v1650
    %vm1652 = vweird.f32 %v1644
    %vm1653 = vweird.f32 %v1646
    %vm1654 = vmor %vm1652, %vm1653
    %v1655 = vsel %vm1654, %v1646, %v1651
    %v1656 = vrsqrt.pop %v1645
    %v1657 = vmul.f32 %v1656, %v1645
    %v1658 = vmul.f32 %v1657, %v1656
    %v1659 = vmul.f32 0.5, %v1658
    %v1660 = vsub.f32 1.5, %v1659
    %v1661 = vmul.f32 %v1656, %v1660
    %vm1662 = vweird.f32 %v1645
    %vm1663 = vweird.f32 %v1656
    %vm1664 = vmor %vm1662, %vm1663
    %v1665 = vsel %vm1664, %v1656, %v1661
    %v1666 = vmul.f32 %v1632, %v1655
    %v1667 = vmul.f32 %v1633, %v1665
    %v1668 = vperm.slane %v883, 6
    %v1669 = vmul.f32 %v1666, %v1668
    %v1670 = vmul.f32 %v1667, %v1668
    %v1671 = vperm.slane %v883, 7
    %v1672 = vadd.f32 %v1669, %v1671
    %v1673 = vadd.f32 %v1670, %v1671
    %s1674 = scalar_lea.vmem %s2, 96
    %v1675 = vld [vmem:[%s1674] sm:$0xff]
    %v1676 = vld [vmem:[%s1674 + $0xc] sm:$0xff]
    %v1677 = vld [vmem:[%s1674 + $0x18] sm:$0xff]
    %v1678 = vld [vmem:[%s1674 + $0x24] sm:$0xff]
    %s1679 = scalar_lea.vmem [#allocation5], 16
    %v1680 = vld [vmem:[%s1679] sm:$0xff]
    %v1681 = vpack.c.bf16 %v1672, %v1672
    %v1682 = vpack.c.bf16 %v1673, %v1673
    %v1683 = vperm.slane %v1680, 0
    %v1686 = vunpack.c.l.b16 %v1681
    %v1687 = vunpack.c.l.b16 %v1682
    %v1688 = vrot.slane %v1687, 7
    %vm1689 = vcmask 1041409
    %v1690 = vsel %vm1689, %v1688, %v1686
    %v1691 = vpack.c.b16 %v1690, %v1690
    %v1696 = vunpack.c.l.b16 %v1675
    %v1697 = vunpack.c.l.b16 %v1676
    %v1698 = vunpack.c.l.b16 %v1677
    %v1699 = vunpack.c.l.b16 %v1678
    %v1700 = vpack.c.b16 %v1697, %v1696
    %v1701 = vpack.c.b16 %v1699, %v1698
    %v1705 = vsel %vm102, %v1691, 0
    %1707 = vmatpush.bf16.msra.mxu0 0
    %1708 = vmatpush.bf16.msra.mxu0 0
    %1709 = vmatpush.bf16.msra.mxu0 0
    %1710 = vmatpush.bf16.msra.mxu0 0
    %1711 = vmatpush.bf16.msra.mxu0 0
    %1712 = vmatpush.bf16.msra.mxu0 0
    %1713 = vmatpush.bf16.msra.mxu0 %v1701
    %1714 = vmatpush.bf16.msra.mxu0 %v1700
    %1715 = vmatmul.bf16.gmra.mxu0 %v1705
    %v1716 = vpop.f32.mrf.mxu0
    %v1717 = vadd.f32 %v1683, %v1716
    %v1718 = vpop.f32.mrf.mxu0
    %1719 = vdwg.mxu0
    %v1720 = vtanh.pop %v1717
    %v1721 = vpack.c.bf16 %v1720, %v1720
    %v1722 = vperm.slane %v1680, 1
    %v1723 = vunpack.c.h.b16 %v1675
    %v1724 = vunpack.c.h.b16 %v1676
    %v1725 = vunpack.c.h.b16 %v1677
    %v1726 = vunpack.c.h.b16 %v1678
    %v1727 = vpack.c.b16 %v1724, %v1723
    %v1728 = vpack.c.b16 %v1726, %v1725
    %v1732 = vsel %vm102, %v1721, 0
    %1734 = vmatpush.bf16.msra.mxu0 0
    %1735 = vmatpush.bf16.msra.mxu0 0
    %1736 = vmatpush.bf16.msra.mxu0 0
    %1737 = vmatpush.bf16.msra.mxu0 0
    %1738 = vmatpush.bf16.msra.mxu0 0
    %1739 = vmatpush.bf16.msra.mxu0 0
    %1740 = vmatpush.bf16.msra.mxu0 %v1728
    %1741 = vmatpush.bf16.msra.mxu0 %v1727
    %1742 = vmatmul.bf16.gmra.mxu0 %v1732
    %v1743 = vpop.f32.mrf.mxu0
    %v1744 = vadd.f32 %v1722, %v1743
    %v1745 = vpop.f32.mrf.mxu0
    %1746 = vdwg.mxu0
    %1747 = vst [vmem:[#allocation7] sm:$0x3] %v1744
    // Predicated region
    $region30: #{roberta_classifier_forward.1} parent=1 // pred_check
      _
    $region31: #{roberta_classifier_forward.1} parent=1 // pred_check_branch
      %1749 = sbr.rel (0) target = $region33
    $region32: #{roberta_classifier_forward.1} parent=1 // pred_region
      %1751 = vsyncadd [#allocation4], 0
      %s1753 = sshll.u32 [#allocation7], 4
      %s1754 = int_to_ptr.vmem [resolvable:$true] %s1753
      %s1755 = sshll.u32 %s5, 4
      %s1756 = int_to_ptr.hbm [resolvable:$true] %s1755
      %1758 = dma.vmem_to_hbm [thread:$0]  %s1754, 32, %s1756, [#allocation4]
    $region33: #{roberta_classifier_forward.1} parent=1 // pred_fallthru
      _
    // Predicated region
    $region34: #{roberta_classifier_forward.1} parent=1 // pred_check
      _
    $region35: #{roberta_classifier_forward.1} parent=1 // pred_check_branch
      %1760 = sbr.rel (0) target = $region37
    $region36: #{roberta_classifier_forward.1} parent=1 // pred_region
      %1762 = dma.done [#allocation4], 32
    $region37: #{roberta_classifier_forward.1} parent=1 // pred_fallthru
      _
    %1763 = vsyncpa [#allocation3], 1
    %1764 = vsyncpa [#allocation6], 1
    %1765 = vsyncpa [#allocation4], 1

</llo_original>
